<compile_context>
chip_gen: v6e
topology: v6e:2x2x1
jax: 0.10.0
libtpu: 0.0.40
codegen_flags: <defaults>
</compile_context>

<pallas_src>
import functools

import jax
import jax.numpy as jnp
from jax.experimental import pallas as pl
from jax.experimental.pallas import tpu as pltpu

_INV_SQRT2 = 0.7071067811865476  # 1/sqrt(2) for exact (erf) GELU


def _block_mlp_kernel(x_ref, g_ref, bt_ref, w1_ref, b1_ref, w2_ref, b2_ref,
                      o_ref, xn_ref, acc_ref, *, ln_eps):
    k = pl.program_id(1)

    @pl.when(k == 0)
    def _init():
        # LayerNorm of the (resident) x tile in f32; keep a bf16 copy for the MXU.
        x = x_ref[...].astype(jnp.float32)
        mu = jnp.mean(x, axis=-1, keepdims=True)
        xc = x - mu
        var = jnp.mean(xc * xc, axis=-1, keepdims=True)
        inv = jax.lax.rsqrt(var + ln_eps)
        xn = xc * inv * g_ref[...] + bt_ref[...]
        xn_ref[...] = xn.astype(jnp.bfloat16)
        acc_ref[...] = jnp.zeros_like(acc_ref)

    # fc1 on a TH-wide hidden slice: [TM,D]bf16 @ [D,TH]bf16 -> f32 accumulate.
    h = jnp.dot(xn_ref[...], w1_ref[...], preferred_element_type=jnp.float32)
    h = h + b1_ref[...]
    # exact (erf-based) GELU in f32, matching torch.nn.GELU default
    h = 0.5 * h * (1.0 + jax.lax.erf(h * _INV_SQRT2))
    # dropout p=0.0 is identity
    # fc2 partial product, accumulated across hidden slices in f32 scratch.
    acc_ref[...] += jnp.dot(h.astype(jnp.bfloat16), w2_ref[...],
                            preferred_element_type=jnp.float32)

    @pl.when(k == pl.num_programs(1) - 1)
    def _finalize():
        y = acc_ref[...] + b2_ref[...]
        # residual add with the original (un-normalized) x tile
        o_ref[...] = (x_ref[...].astype(jnp.float32) + y).astype(o_ref.dtype)


def block_mlp_residual(x, ln_g, ln_b, w1, b1, w2, b2, *, tm=256, th=512,
                       ln_eps=1e-5, vmem_limit_bytes=None):
    """Fused  x + fc2(GELU(fc1(LayerNorm(x))))  over token rows.

    x    : [M, D]    residual stream (f32 or bf16)
    ln_g : [D]       norm2.weight          ln_b : [D]   norm2.bias
    w1   : [D, H]    fc1.weight^T          b1   : [H]
    w2   : [H, D]    fc2.weight^T          b2   : [D]
    """
    M, D = x.shape
    H = w1.shape[1]
    Dout = w2.shape[1]
    assert w2.shape[0] == H and b1.shape == (H,) and b2.shape == (Dout,)
    assert Dout == D, "residual add requires fc2 output dim == embed dim"
    out_dtype = x.dtype

    # bf16 MXU operands for the weights; biases / LN params stay f32.
    w1_bf = w1.astype(jnp.bfloat16)
    w2_bf = w2.astype(jnp.bfloat16)
    b1_f = b1.reshape(1, H).astype(jnp.float32)
    b2_f = b2.reshape(1, Dout).astype(jnp.float32)
    g_f = ln_g.reshape(1, D).astype(jnp.float32)
    bt_f = ln_b.reshape(1, D).astype(jnp.float32)

    # Row tile: multiple of 8 sublanes, no larger than M.
    tm = max(8, min(tm, M))
    tm = (tm // 8) * 8
    num_m = pl.cdiv(M, tm)
    m_pad = num_m * tm
    x_in = x
    if m_pad != M:
        # TODO(synk): mask the last tile with pl.when instead of this HBM pass;
        # real ViT token counts make tm | M easy to arrange.
        x_in = jnp.pad(x, ((0, m_pad - M), (0, 0)))

    # Hidden-axis tile: slice the fc1/fc2 weights so only [D,TH]/[TH,Dout] are resident.
    th = min(th, H)
    if H % th != 0:
        th = H  # fall back to a single hidden chunk
    num_h = H // th

    xb = jnp.dtype(x.dtype).itemsize
    ob = jnp.dtype(out_dtype).itemsize

    if vmem_limit_bytes is None:
        est = (
            2 * tm * D * xb            # x tile (double-buffered)
            + 2 * D * th * 2           # w1 slice (bf16, double-buffered)
            + 2 * th * Dout * 2        # w2 slice (bf16, double-buffered)
            + 2 * (th + Dout + 2 * D) * 4  # biases + LN params
            + 2 * tm * Dout * ob       # out tile
            + tm * D * 2               # xn scratch (bf16)
            + tm * Dout * 4            # fc2 accumulator (f32)
            + tm * th * 4              # f32 intermediate
        )
        try:
            phys = getattr(pltpu.get_tpu_info(), "vmem_capacity_bytes", 64 << 20)
        except Exception:  # pragma: no cover - info query not available
            phys = 64 << 20
        vmem_limit_bytes = int(min(max(2 * est + (8 << 20), 32 << 20),
                                   phys - (4 << 20)))

    cost = pl.CostEstimate(
        flops=2 * m_pad * H * (D + Dout) + 10 * m_pad * D,
        transcendentals=m_pad * H + m_pad,          # erf per hidden elem + rsqrt per row
        bytes_accessed=(m_pad * D * xb + D * H * 2 + H * Dout * 2
                        + (H + Dout + 2 * D) * 4 + m_pad * Dout * ob),
    )

    kernel = functools.partial(_block_mlp_kernel, ln_eps=ln_eps)

    out = pl.pallas_call(
        kernel,
        out_shape=jax.ShapeDtypeStruct((m_pad, Dout), out_dtype),
        grid_spec=pltpu.PrefetchScalarGridSpec(
            num_scalar_prefetch=0,
            grid=(num_m, num_h),
            in_specs=[
                pl.BlockSpec((tm, D), lambda i, k: (i, 0)),      # x tile (resident over k)
                pl.BlockSpec((1, D), lambda i, k: (0, 0)),       # LN gamma
                pl.BlockSpec((1, D), lambda i, k: (0, 0)),       # LN beta
                pl.BlockSpec((D, th), lambda i, k: (0, k)),      # w1 slice (pipelined)
                pl.BlockSpec((1, th), lambda i, k: (0, k)),      # b1 slice
                pl.BlockSpec((th, Dout), lambda i, k: (k, 0)),   # w2 slice (pipelined)
                pl.BlockSpec((1, Dout), lambda i, k: (0, 0)),    # b2
            ],
            out_specs=pl.BlockSpec((tm, Dout), lambda i, k: (i, 0)),
            scratch_shapes=[
                pltpu.VMEM((tm, D), jnp.bfloat16),    # normalized x (reused across k)
                pltpu.VMEM((tm, Dout), jnp.float32),  # fc2 accumulator
            ],
        ),
        compiler_params=pltpu.CompilerParams(
            dimension_semantics=("parallel", "arbitrary"),
            vmem_limit_bytes=vmem_limit_bytes,
        ),
        cost_estimate=cost,
    )(x_in, g_f, bt_f, w1_bf, b1_f, w2_bf, b2_f)

    if m_pad != M:
        out = out[:M]
    return out


def block_mlp_residual_ref(x, ln_g, ln_b, w1, b1, w2, b2, ln_eps=1e-5):
    """Pure-JAX reference mirroring the kernel's bf16-operand / f32-accumulate numerics."""
    xf = x.astype(jnp.float32)
    mu = xf.mean(-1, keepdims=True)
    xc = xf - mu
    var = (xc * xc).mean(-1, keepdims=True)
    xn = xc * jax.lax.rsqrt(var + ln_eps) * ln_g.reshape(1, -1) + ln_b.reshape(1, -1)
    xn = xn.astype(jnp.bfloat16).astype(jnp.float32)
    w1f = w1.astype(jnp.bfloat16).astype(jnp.float32)
    w2f = w2.astype(jnp.bfloat16).astype(jnp.float32)
    h = xn @ w1f + b1.reshape(1, -1)
    h = 0.5 * h * (1.0 + jax.lax.erf(h * _INV_SQRT2))
    h = h.astype(jnp.bfloat16).astype(jnp.float32)
    y = h @ w2f + b2.reshape(1, -1)
    return xf + y


if __name__ == "__main__":
    key = jax.random.PRNGKey(0)
    k_x, k_w1, k_b1, k_w2, k_b2, k_g, k_bt = jax.random.split(key, 7)

    # Small but lane-dense shapes consistent with the module:
    # batch=2, 256x256 image / patch 16 -> 256 tokens each => M = 512 rows
    # embed_dim=128, mlp_ratio=4 -> hidden=512, out=embed_dim=128.
    B, S = 2, 256
    D_in, D_hid = 128, 512
    M = B * S

    x = jax.random.normal(k_x, (M, D_in), dtype=jnp.float32)

    # LayerNorm params (module inits weight=1, bias=0; perturb slightly to exercise them)
    ln_g = 1.0 + 0.05 * jax.random.normal(k_g, (D_in,), dtype=jnp.float32)
    ln_b = 0.05 * jax.random.normal(k_bt, (D_in,), dtype=jnp.float32)

    # PyTorch-Linear-style init, stored already transposed to [in, out].
    bound1 = 1.0 / jnp.sqrt(jnp.float32(D_in))
    w1 = jax.random.uniform(k_w1, (D_in, D_hid), jnp.float32, -bound1, bound1)
    b1 = jax.random.uniform(k_b1, (D_hid,), jnp.float32, -bound1, bound1)
    bound2 = 1.0 / jnp.sqrt(jnp.float32(D_hid))
    w2 = jax.random.uniform(k_w2, (D_hid, D_in), jnp.float32, -bound2, bound2)
    b2 = jax.random.uniform(k_b2, (D_in,), jnp.float32, -bound2, bound2)

    # tm=256 -> 2 even "parallel" row tiles; th=256 -> 2 "arbitrary" hidden steps
    # (exercises the accumulator init/finalize path on a small H).
    out = block_mlp_residual(x, ln_g, ln_b, w1, b1, w2, b2, tm=256, th=256)
    out = jax.block_until_ready(out)

    ref = block_mlp_residual_ref(x, ln_g, ln_b, w1, b1, w2, b2)
    assert out.shape == (M, D_in)
    assert jnp.allclose(out, ref, atol=2e-2, rtol=2e-2), "mismatch vs reference"

    print("KERNEL_OK")
</pallas_src>

<mosaic_0001>
module attributes {stable_mosaic.version = 11 : i64} {
  func.func @_block_mlp_kernel(%arg0: i32, %arg1: i32, %arg2: memref<256x128xf32, #tpu.memory_space<vmem>>, %arg3: memref<1x128xf32, #tpu.memory_space<vmem>>, %arg4: memref<1x128xf32, #tpu.memory_space<vmem>>, %arg5: memref<128x256xbf16, #tpu.memory_space<vmem>>, %arg6: memref<1x256xf32, #tpu.memory_space<vmem>>, %arg7: memref<256x128xbf16, #tpu.memory_space<vmem>>, %arg8: memref<1x128xf32, #tpu.memory_space<vmem>>, %arg9: memref<256x128xf32, #tpu.memory_space<vmem>>, %arg10: memref<256x128xbf16, #tpu.memory_space<vmem>>, %arg11: memref<256x128xf32, #tpu.memory_space<vmem>>) attributes {dimension_semantics = [#tpu.dimension_semantics<parallel>, #tpu.dimension_semantics<arbitrary>], iteration_bounds = array<i64: 2, 2>, scalar_prefetch = 0 : i64, scratch_operands = 2 : i64, tpu.core_type = #tpu.core_type<tc>, window_params = [{transform_indices = @transform_0, window_bounds = array<i64: 256, 128>}, {pipeline_mode = #tpu.pipeline_mode<synchronous>, transform_indices = @transform_1, window_bounds = array<i64: 1, 128>}, {pipeline_mode = #tpu.pipeline_mode<synchronous>, transform_indices = @transform_2, window_bounds = array<i64: 1, 128>}, {transform_indices = @transform_3, window_bounds = array<i64: 128, 256>}, {transform_indices = @transform_4, window_bounds = array<i64: 1, 256>}, {transform_indices = @transform_5, window_bounds = array<i64: 256, 128>}, {pipeline_mode = #tpu.pipeline_mode<synchronous>, transform_indices = @transform_6, window_bounds = array<i64: 1, 128>}, {transform_indices = @transform_7, window_bounds = array<i64: 256, 128>}]} {
    %c0_i32 = arith.constant 0 : i32
    %0 = arith.cmpi eq, %arg1, %c0_i32 : i32
    %1 = arith.extui %0 : i1 to i32
    %c0_i32_0 = arith.constant 0 : i32
    %2 = arith.cmpi ne, %1, %c0_i32_0 : i32
    scf.if %2 {
      %c0_17 = arith.constant 0 : index
      %c0_18 = arith.constant 0 : index
      %26 = vector.load %arg2[%c0_17, %c0_18] : memref<256x128xf32, #tpu.memory_space<vmem>>, vector<256x128xf32>
      %cst_19 = arith.constant dense<0.000000e+00> : vector<256xf32>
      %27 = vector.multi_reduction <add>, %26, %cst_19 [1] : vector<256x128xf32> to vector<256xf32>
      %28 = vector.shape_cast %27 : vector<256xf32> to vector<256x1xf32>
      %cst_20 = arith.constant 1.280000e+02 : f32
      %29 = vector.broadcast %cst_20 : f32 to vector<256x1xf32>
      %30 = arith.divf %28, %29 : vector<256x1xf32>
      %31 = vector.broadcast %30 : vector<256x1xf32> to vector<256x128xf32>
      %32 = arith.subf %26, %31 : vector<256x128xf32>
      %33 = arith.mulf %32, %32 : vector<256x128xf32>
      %cst_21 = arith.constant dense<0.000000e+00> : vector<256xf32>
      %34 = vector.multi_reduction <add>, %33, %cst_21 [1] : vector<256x128xf32> to vector<256xf32>
      %35 = vector.shape_cast %34 : vector<256xf32> to vector<256x1xf32>
      %cst_22 = arith.constant 1.280000e+02 : f32
      %36 = vector.broadcast %cst_22 : f32 to vector<256x1xf32>
      %37 = arith.divf %35, %36 : vector<256x1xf32>
      %cst_23 = arith.constant 9.99999974E-6 : f32
      %38 = vector.broadcast %cst_23 : f32 to vector<256x1xf32>
      %39 = arith.addf %37, %38 : vector<256x1xf32>
      %40 = math.rsqrt %39 : vector<256x1xf32>
      %41 = vector.broadcast %40 : vector<256x1xf32> to vector<256x128xf32>
      %42 = arith.mulf %32, %41 : vector<256x128xf32>
      %c0_24 = arith.constant 0 : index
      %c0_25 = arith.constant 0 : index
      %43 = vector.load %arg3[%c0_24, %c0_25] : memref<1x128xf32, #tpu.memory_space<vmem>>, vector<1x128xf32>
      %44 = vector.broadcast %43 : vector<1x128xf32> to vector<256x128xf32>
      %45 = arith.mulf %42, %44 : vector<256x128xf32>
      %c0_26 = arith.constant 0 : index
      %c0_27 = arith.constant 0 : index
      %46 = vector.load %arg4[%c0_26, %c0_27] : memref<1x128xf32, #tpu.memory_space<vmem>>, vector<1x128xf32>
      %47 = vector.broadcast %46 : vector<1x128xf32> to vector<256x128xf32>
      %48 = arith.addf %45, %47 : vector<256x128xf32>
      %49 = arith.truncf %48 : vector<256x128xf32> to vector<256x128xbf16>
      %c0_28 = arith.constant 0 : index
      %c0_29 = arith.constant 0 : index
      %50 = vector.load %arg10[%c0_28, %c0_29] : memref<256x128xbf16, #tpu.memory_space<vmem>>, vector<256x128xbf16>
      tpu.vector_store %arg10[%c0_28, %c0_29], %49 {strides = array<i32>} : memref<256x128xbf16, #tpu.memory_space<vmem>>, vector<256x128xbf16>,
      %cst_30 = arith.constant 0.000000e+00 : f32
      %51 = vector.broadcast %cst_30 : f32 to vector<256x128xf32>
      %c0_31 = arith.constant 0 : index
      %c0_32 = arith.constant 0 : index
      %52 = vector.load %arg11[%c0_31, %c0_32] : memref<256x128xf32, #tpu.memory_space<vmem>>, vector<256x128xf32>
      tpu.vector_store %arg11[%c0_31, %c0_32], %51 {strides = array<i32>} : memref<256x128xf32, #tpu.memory_space<vmem>>, vector<256x128xf32>,
    } else {
    }
    %c0 = arith.constant 0 : index
    %c0_1 = arith.constant 0 : index
    %3 = vector.load %arg10[%c0, %c0_1] : memref<256x128xbf16, #tpu.memory_space<vmem>>, vector<256x128xbf16>
    %c0_2 = arith.constant 0 : index
    %c0_3 = arith.constant 0 : index
    %4 = vector.load %arg5[%c0_2, %c0_3] : memref<128x256xbf16, #tpu.memory_space<vmem>>, vector<128x256xbf16>
    %cst = arith.constant dense<0.000000e+00> : vector<256x256xf32>
    %5 = tpu.matmul %3, %4, %cst {dimension_numbers = #tpu.dot_dimension_numbers<[1], [0], [0], [1], [0, 0, 1, 1], [], []>} : vector<256x128xbf16>, vector<128x256xbf16>, vector<256x256xf32> -> vector<256x256xf32>
    %c0_4 = arith.constant 0 : index
    %c0_5 = arith.constant 0 : index
    %6 = vector.load %arg6[%c0_4, %c0_5] : memref<1x256xf32, #tpu.memory_space<vmem>>, vector<1x256xf32>
    %7 = vector.broadcast %6 : vector<1x256xf32> to vector<256x256xf32>
    %8 = arith.addf %5, %7 : vector<256x256xf32>
    %cst_6 = arith.constant 5.000000e-01 : f32
    %9 = vector.broadcast %cst_6 : f32 to vector<256x256xf32>
    %10 = arith.mulf %9, %8 : vector<256x256xf32>
    %cst_7 = arith.constant 0.707106769 : f32
    %11 = vector.broadcast %cst_7 : f32 to vector<256x256xf32>
    %12 = arith.mulf %8, %11 : vector<256x256xf32>
    %13 = math.erf %12 : vector<256x256xf32>
    %cst_8 = arith.constant 1.000000e+00 : f32
    %14 = vector.broadcast %cst_8 : f32 to vector<256x256xf32>
    %15 = arith.addf %14, %13 : vector<256x256xf32>
    %16 = arith.mulf %10, %15 : vector<256x256xf32>
    %c0_9 = arith.constant 0 : index
    %c0_10 = arith.constant 0 : index
    %17 = vector.load %arg11[%c0_9, %c0_10] : memref<256x128xf32, #tpu.memory_space<vmem>>, vector<256x128xf32>
    %18 = arith.truncf %16 : vector<256x256xf32> to vector<256x256xbf16>
    %c0_11 = arith.constant 0 : index
    %c0_12 = arith.constant 0 : index
    %19 = vector.load %arg7[%c0_11, %c0_12] : memref<256x128xbf16, #tpu.memory_space<vmem>>, vector<256x128xbf16>
    %cst_13 = arith.constant dense<0.000000e+00> : vector<256x128xf32>
    %20 = tpu.matmul %18, %19, %cst_13 {dimension_numbers = #tpu.dot_dimension_numbers<[1], [0], [0], [1], [0, 0, 1, 1], [], []>} : vector<256x256xbf16>, vector<256x128xbf16>, vector<256x128xf32> -> vector<256x128xf32>
    %21 = arith.addf %17, %20 : vector<256x128xf32>
    %c0_14 = arith.constant 0 : index
    %c0_15 = arith.constant 0 : index
    %22 = vector.load %arg11[%c0_14, %c0_15] : memref<256x128xf32, #tpu.memory_space<vmem>>, vector<256x128xf32>
    tpu.vector_store %arg11[%c0_14, %c0_15], %21 {strides = array<i32>} : memref<256x128xf32, #tpu.memory_space<vmem>>, vector<256x128xf32>,
    %c1_i32 = arith.constant 1 : i32
    %23 = arith.cmpi eq, %arg1, %c1_i32 : i32
    %24 = arith.extui %23 : i1 to i32
    %c0_i32_16 = arith.constant 0 : i32
    %25 = arith.cmpi ne, %24, %c0_i32_16 : i32
    scf.if %25 {
      %c0_17 = arith.constant 0 : index
      %c0_18 = arith.constant 0 : index
      %26 = vector.load %arg11[%c0_17, %c0_18] : memref<256x128xf32, #tpu.memory_space<vmem>>, vector<256x128xf32>
      %c0_19 = arith.constant 0 : index
      %c0_20 = arith.constant 0 : index
      %27 = vector.load %arg8[%c0_19, %c0_20] : memref<1x128xf32, #tpu.memory_space<vmem>>, vector<1x128xf32>
      %28 = vector.broadcast %27 : vector<1x128xf32> to vector<256x128xf32>
      %29 = arith.addf %26, %28 : vector<256x128xf32>
      %c0_21 = arith.constant 0 : index
      %c0_22 = arith.constant 0 : index
      %30 = vector.load %arg2[%c0_21, %c0_22] : memref<256x128xf32, #tpu.memory_space<vmem>>, vector<256x128xf32>
      %31 = arith.addf %30, %29 : vector<256x128xf32>
      %c0_23 = arith.constant 0 : index
      %c0_24 = arith.constant 0 : index
      %32 = vector.load %arg9[%c0_23, %c0_24] : memref<256x128xf32, #tpu.memory_space<vmem>>, vector<256x128xf32>
      tpu.vector_store %arg9[%c0_23, %c0_24], %31 {strides = array<i32>} : memref<256x128xf32, #tpu.memory_space<vmem>>, vector<256x128xf32>,
    } else {
    }
    return
  }
  func.func @transform_0(%arg0: i32, %arg1: i32) -> (i32, i32) {
    %c0_i32 = arith.constant 0 : i32
    %c0_i32_0 = arith.constant 0 : i32
    return %arg0, %c0_i32 : i32, i32
  }
  func.func @transform_1(%arg0: i32, %arg1: i32) -> (i32, i32) {
    %c0_i32 = arith.constant 0 : i32
    %c0_i32_0 = arith.constant 0 : i32
    %c0_i32_1 = arith.constant 0 : i32
    return %c0_i32, %c0_i32_0 : i32, i32
  }
  func.func @transform_2(%arg0: i32, %arg1: i32) -> (i32, i32) {
    %c0_i32 = arith.constant 0 : i32
    %c0_i32_0 = arith.constant 0 : i32
    %c0_i32_1 = arith.constant 0 : i32
    return %c0_i32, %c0_i32_0 : i32, i32
  }
  func.func @transform_3(%arg0: i32, %arg1: i32) -> (i32, i32) {
    %c0_i32 = arith.constant 0 : i32
    %c0_i32_0 = arith.constant 0 : i32
    return %c0_i32, %arg1 : i32, i32
  }
  func.func @transform_4(%arg0: i32, %arg1: i32) -> (i32, i32) {
    %c0_i32 = arith.constant 0 : i32
    %c0_i32_0 = arith.constant 0 : i32
    return %c0_i32, %arg1 : i32, i32
  }
  func.func @transform_5(%arg0: i32, %arg1: i32) -> (i32, i32) {
    %c0_i32 = arith.constant 0 : i32
    %c0_i32_0 = arith.constant 0 : i32
    return %arg1, %c0_i32 : i32, i32
  }
  func.func @transform_6(%arg0: i32, %arg1: i32) -> (i32, i32) {
    %c0_i32 = arith.constant 0 : i32
    %c0_i32_0 = arith.constant 0 : i32
    %c0_i32_1 = arith.constant 0 : i32
    return %c0_i32, %c0_i32_0 : i32, i32
  }
  func.func @transform_7(%arg0: i32, %arg1: i32) -> (i32, i32) {
    %c0_i32 = arith.constant 0 : i32
    %c0_i32_0 = arith.constant 0 : i32
    return %arg0, %c0_i32 : i32, i32
  }
}

</mosaic_0001>

<llo_original>
// kernel: tpu_custom_call.1
$region0: #{tpu_custom_call.1}
  #allocation0 [shape = 'u32[]', space=smem, size = 0x4, offset = 0x4, fixed_abs, tag = 'smem constant byte address 0x4 - core index']
  #allocation1 [shape = 'u32[144,128]{1,0:T(1,128)}', space=vmem, size = 0x12000, scoped, tag = 'internal scratch']
  #allocation2 [shape = 'bf16[256,128]{1,0:T(8,128)(2,1)}', space=vmem, size = 0x10000, scoped, tag = 'scratch operand']
  #allocation3 [shape = 'f32[256,128]{1,0:T(8,128)}', space=vmem, size = 0x20000, scoped, tag = 'scratch operand']
  %s0 = inlined_call_operand.hbm [shape: f32[512,128], index: 0, kind: input, shape index: {}]
  %s1 = inlined_call_operand.vmem [shape: f32[1,128], index: 1, kind: input, shape index: {}]
  %s2 = inlined_call_operand.vmem [shape: f32[1,128], index: 2, kind: input, shape index: {}]
  %s3 = inlined_call_operand.hbm [shape: bf16[128,512], index: 3, kind: input, shape index: {}]
  %s4 = inlined_call_operand.vmem [shape: f32[1,512], index: 4, kind: input, shape index: {}]
  %s5 = inlined_call_operand.hbm [shape: bf16[512,128], index: 5, kind: input, shape index: {}]
  %s6 = inlined_call_operand.vmem [shape: f32[1,128], index: 6, kind: input, shape index: {}]
  %s7 = inlined_call_operand.hbm [shape: f32[512,128], index: 7, kind: output, shape index: {}]
  %s8 = sld [smem:[#allocation0]]
  $region81: #{tpu_custom_call.1} parent=0
    _
  %s10 = ssub.s32 1, %s8
  %s11 = scalar_select 0, %s10, %s8
  $region1: #{tpu_custom_call.1} parent=0
    #allocation4 [shape = 'u8[262144]{0}', space=vmem, size = 0x40000, scoped, tag = 'input window, operand 0']
    #allocation5 [shape = 's32[2]{0}', space=sflag, size = 0x8, scoped, tag = 'scoped memory for tpu_custom_call.1']
    #allocation6 [shape = 's32[2]{0}', space=sflag, size = 0x8, scoped, tag = 'scoped memory for tpu_custom_call.1']
    #allocation7 [shape = 'u8[131072]{0}', space=vmem, size = 0x20000, scoped, tag = 'input window, operand 3']
    #allocation8 [shape = 's32[2]{0}', space=sflag, size = 0x8, scoped, tag = 'scoped memory for tpu_custom_call.1']
    #allocation9 [shape = 'u8[131072]{0}', space=vmem, size = 0x20000, scoped, tag = 'input window, operand 5']
    #allocation10 [shape = 'u8[262144]{0}', space=vmem, size = 0x40000, scoped, tag = 'output window, operand 0']
    %12 = vsyncpa [#allocation5], 0
    %s13 = scalar_lea.sflag [#allocation5], 1
    %14 = vsyncpa %s13, 0
    %15 = vsyncpa [#allocation8], 0
    %s16 = scalar_lea.sflag [#allocation8], 1
    %17 = vsyncpa %s16, 0
    %18 = vsyncpa [#allocation6], 0
    %s19 = scalar_lea.sflag [#allocation6], 1
    %20 = vsyncpa %s19, 0
    loop: start=0, step=1, limit=6
    $region2: #{tpu_custom_call.1} parent=1 // loop_pre_header
      _
    $region3: #{tpu_custom_call.1} parent=1 // loop_header
      %s22 = sphi 0, %s26
      %p23 = scmp.ge.s32.totalorder %s22, 6
      %s29 = sphi 0, %s41
      %s30 = sphi 0, %s37
      %s31 = sphi 0, %s29
      %s32 = sphi 0, %s30
      %s33 = sphi 0, %s31
      %s34 = sphi 0, %s32
      %s44 = sphi 0, %s46
      %s47 = sphi 0, %s44
      %s48 = sphi 0, %s47
      %s64 = sphi 0, %s48
      %s68 = sphi 0, %s68
      %s70 = sphi 0, %s68
      %s71 = sphi 0, %s70
      %s85 = sphi 0, %s71
      %s89 = sphi 0, %s89
      %s91 = sphi 0, %s89
      %s92 = sphi 0, %s91
      %s106 = sphi 0, %s92
      %s112 = sphi 0, %s114
      %s115 = sphi 0, %s112
      %s116 = sphi 0, %s115
      %s132 = sphi 0, %s116
      %s138 = sphi 0, %s140
      %s141 = sphi 0, %s138
      %s142 = sphi 0, %s141
      %s158 = sphi 0, %s142
      %s164 = sphi 0, %s166
      %s167 = sphi 0, %s164
      %s168 = sphi 0, %s167
      %s184 = sphi 0, %s168
      %s188 = sphi 0, %s188
      %s190 = sphi 0, %s188
      %s191 = sphi 0, %s190
      %s205 = sphi 0, %s191
      %s211 = sphi 0, %s213
      %s214 = sphi 0, %s211
      %s215 = sphi 0, %s214
      %s231 = sphi 0, %s215
    $region4: #{tpu_custom_call.1} parent=1 // loop_header_branch
      %25 = sbr.rel (%p23) target = $region8
    $region5: #{tpu_custom_call.1} parent=1 // loop_body
      %s27 = ssub.s32 %s22, 1
      %s28 = ssub.s32 %s22, 2
      %s35 = sadd.s32 1, %s30
      %p36 = scmp.ge.s32.totalorder %s35, 2
      %s37 = scalar_select %p36, 0, %s35
      %s38 = sadd.s32 1, %s29
      %s39 = scalar_select %p36, %s38, %s29
      %p40 = scmp.ge.s32.totalorder %s39, 2
      %s41 = scalar_select %p40, 0, %s39
      %s42 = ssub.s32 %s29, %s41
      %p43 = scmp.eq.s32.totalorder %s42, 0
      %s45 = sadd.s32 %s44, 1
      %s46 = scalar_select %p43, %s44, %s45
      %p49 = pneg %p43
      %p50 = scmp.eq.s32.totalorder %s22, 3
      %p51 = por %p49, %p50
      %p52 = scmp.ne.s32.totalorder %s44, %s47
      %p53 = scmp.eq.s32.totalorder %s22, 0
      %p54 = por %p52, %p53
      %p55 = scmp.ne.s32.totalorder %s44, %s47
      %p56 = scmp.eq.s32.totalorder %s27, 3
      %p57 = por %p55, %p56
      %p58 = scmp.ne.s32.totalorder %s47, %s48
      %p59 = scmp.eq.s32.totalorder %s27, 0
      %p60 = por %p58, %p59
      %p61 = scmp.ne.s32.totalorder %s47, %s48
      %p62 = scmp.eq.s32.totalorder %s28, 3
      %p63 = por %p61, %p62
      %p65 = scmp.ne.s32.totalorder %s48, %s64
      %p66 = scmp.eq.s32.totalorder %s28, 0
      %p67 = por %p65, %p66
      %s69 = sadd.s32 %s68, 1
      %p72 = scmp.eq.s32.totalorder %s22, 3
      %p73 = scmp.ne.s32.totalorder %s68, %s70
      %p74 = scmp.eq.s32.totalorder %s22, 0
      %p75 = por %p73, %p74
      %p76 = scmp.ne.s32.totalorder %s68, %s70
      %p77 = scmp.eq.s32.totalorder %s27, 3
      %p78 = por %p76, %p77
      %p79 = scmp.ne.s32.totalorder %s70, %s71
      %p80 = scmp.eq.s32.totalorder %s27, 0
      %p81 = por %p79, %p80
      %p82 = scmp.ne.s32.totalorder %s70, %s71
      %p83 = scmp.eq.s32.totalorder %s28, 3
      %p84 = por %p82, %p83
      %p86 = scmp.ne.s32.totalorder %s71, %s85
      %p87 = scmp.eq.s32.totalorder %s28, 0
      %p88 = por %p86, %p87
      %s90 = sadd.s32 %s89, 1
      %p93 = scmp.eq.s32.totalorder %s22, 3
      %p94 = scmp.ne.s32.totalorder %s89, %s91
      %p95 = scmp.eq.s32.totalorder %s22, 0
      %p96 = por %p94, %p95
      %p97 = scmp.ne.s32.totalorder %s89, %s91
      %p98 = scmp.eq.s32.totalorder %s27, 3
      %p99 = por %p97, %p98
      %p100 = scmp.ne.s32.totalorder %s91, %s92
      %p101 = scmp.eq.s32.totalorder %s27, 0
      %p102 = por %p100, %p101
      %p103 = scmp.ne.s32.totalorder %s91, %s92
      %p104 = scmp.eq.s32.totalorder %s28, 3
      %p105 = por %p103, %p104
      %p107 = scmp.ne.s32.totalorder %s92, %s106
      %p108 = scmp.eq.s32.totalorder %s28, 0
      %p109 = por %p107, %p108
      %s110 = ssub.s32 %s30, %s37
      %p111 = scmp.eq.s32.totalorder %s110, 0
      %s113 = sadd.s32 %s112, 1
      %s114 = scalar_select %p111, %s112, %s113
      %p117 = pneg %p111
      %p118 = scmp.eq.s32.totalorder %s22, 3
      %p119 = por %p117, %p118
      %p120 = scmp.ne.s32.totalorder %s112, %s115
      %p121 = scmp.eq.s32.totalorder %s22, 0
      %p122 = por %p120, %p121
      %p123 = scmp.ne.s32.totalorder %s112, %s115
      %p124 = scmp.eq.s32.totalorder %s27, 3
      %p125 = por %p123, %p124
      %p126 = scmp.ne.s32.totalorder %s115, %s116
      %p127 = scmp.eq.s32.totalorder %s27, 0
      %p128 = por %p126, %p127
      %p129 = scmp.ne.s32.totalorder %s115, %s116
      %p130 = scmp.eq.s32.totalorder %s28, 3
      %p131 = por %p129, %p130
      %p133 = scmp.ne.s32.totalorder %s116, %s132
      %p134 = scmp.eq.s32.totalorder %s28, 0
      %p135 = por %p133, %p134
      %s136 = ssub.s32 %s30, %s37
      %p137 = scmp.eq.s32.totalorder %s136, 0
      %s139 = sadd.s32 %s138, 1
      %s140 = scalar_select %p137, %s138, %s139
      %p143 = pneg %p137
      %p144 = scmp.eq.s32.totalorder %s22, 3
      %p145 = por %p143, %p144
      %p146 = scmp.ne.s32.totalorder %s138, %s141
      %p147 = scmp.eq.s32.totalorder %s22, 0
      %p148 = por %p146, %p147
      %p149 = scmp.ne.s32.totalorder %s138, %s141
      %p150 = scmp.eq.s32.totalorder %s27, 3
      %p151 = por %p149, %p150
      %p152 = scmp.ne.s32.totalorder %s141, %s142
      %p153 = scmp.eq.s32.totalorder %s27, 0
      %p154 = por %p152, %p153
      %p155 = scmp.ne.s32.totalorder %s141, %s142
      %p156 = scmp.eq.s32.totalorder %s28, 3
      %p157 = por %p155, %p156
      %p159 = scmp.ne.s32.totalorder %s142, %s158
      %p160 = scmp.eq.s32.totalorder %s28, 0
      %p161 = por %p159, %p160
      %s162 = ssub.s32 %s30, %s37
      %p163 = scmp.eq.s32.totalorder %s162, 0
      %s165 = sadd.s32 %s164, 1
      %s166 = scalar_select %p163, %s164, %s165
      %p169 = pneg %p163
      %p170 = scmp.eq.s32.totalorder %s22, 3
      %p171 = por %p169, %p170
      %p172 = scmp.ne.s32.totalorder %s164, %s167
      %p173 = scmp.eq.s32.totalorder %s22, 0
      %p174 = por %p172, %p173
      %p175 = scmp.ne.s32.totalorder %s164, %s167
      %p176 = scmp.eq.s32.totalorder %s27, 3
      %p177 = por %p175, %p176
      %p178 = scmp.ne.s32.totalorder %s167, %s168
      %p179 = scmp.eq.s32.totalorder %s27, 0
      %p180 = por %p178, %p179
      %p181 = scmp.ne.s32.totalorder %s167, %s168
      %p182 = scmp.eq.s32.totalorder %s28, 3
      %p183 = por %p181, %p182
      %p185 = scmp.ne.s32.totalorder %s168, %s184
      %p186 = scmp.eq.s32.totalorder %s28, 0
      %p187 = por %p185, %p186
      %s189 = sadd.s32 %s188, 1
      %p192 = scmp.eq.s32.totalorder %s22, 3
      %p193 = scmp.ne.s32.totalorder %s188, %s190
      %p194 = scmp.eq.s32.totalorder %s22, 0
      %p195 = por %p193, %p194
      %p196 = scmp.ne.s32.totalorder %s188, %s190
      %p197 = scmp.eq.s32.totalorder %s27, 3
      %p198 = por %p196, %p197
      %p199 = scmp.ne.s32.totalorder %s190, %s191
      %p200 = scmp.eq.s32.totalorder %s27, 0
      %p201 = por %p199, %p200
      %p202 = scmp.ne.s32.totalorder %s190, %s191
      %p203 = scmp.eq.s32.totalorder %s28, 3
      %p204 = por %p202, %p203
      %p206 = scmp.ne.s32.totalorder %s191, %s205
      %p207 = scmp.eq.s32.totalorder %s28, 0
      %p208 = por %p206, %p207
      %s209 = ssub.s32 %s29, %s41
      %p210 = scmp.eq.s32.totalorder %s209, 0
      %s212 = sadd.s32 %s211, 1
      %s213 = scalar_select %p210, %s211, %s212
      %p216 = pneg %p210
      %p217 = scmp.eq.s32.totalorder %s22, 3
      %p218 = por %p216, %p217
      %p219 = scmp.ne.s32.totalorder %s211, %s214
      %p220 = scmp.eq.s32.totalorder %s22, 0
      %p221 = por %p219, %p220
      %p222 = scmp.ne.s32.totalorder %s211, %s214
      %p223 = scmp.eq.s32.totalorder %s27, 3
      %p224 = por %p222, %p223
      %p225 = scmp.ne.s32.totalorder %s214, %s215
      %p226 = scmp.eq.s32.totalorder %s27, 0
      %p227 = por %p225, %p226
      %p228 = scmp.ne.s32.totalorder %s214, %s215
      %p229 = scmp.eq.s32.totalorder %s28, 3
      %p230 = por %p228, %p229
      %p232 = scmp.ne.s32.totalorder %s215, %s231
      %p233 = scmp.eq.s32.totalorder %s28, 0
      %p234 = por %p232, %p233
      %p235 = scmp.le.s32.totalorder 1, %s22
      %p236 = scmp.lt.s32.totalorder %s22, 5
      %p237 = pnand %p235, %p236
      %p238 = pneg %p237
      // Predicated region
      $region9: #{tpu_custom_call.1} parent=5 // pred_check
        _
      $region10: #{tpu_custom_call.1} parent=5 // pred_check_branch
        %240 = sbr.rel (%p237) target = $region12
      $region11: #{tpu_custom_call.1} parent=5 // pred_region
        %s241 = ssub.s32 %s22, 1
        // Predicated region
        $region13: #{tpu_custom_call.1} parent=11 // pred_check
          %p242 = pneg %p81
        $region14: #{tpu_custom_call.1} parent=11 // pred_check_branch
          %244 = sbr.rel (%p242) target = $region16
        $region15: #{tpu_custom_call.1} parent=11 // pred_region
          _
        $region16: #{tpu_custom_call.1} parent=11 // pred_fallthru
          _
        // Predicated region
        $region17: #{tpu_custom_call.1} parent=11 // pred_check
          %p245 = pneg %p102
        $region18: #{tpu_custom_call.1} parent=11 // pred_check_branch
          %247 = sbr.rel (%p245) target = $region20
        $region19: #{tpu_custom_call.1} parent=11 // pred_region
          _
        $region20: #{tpu_custom_call.1} parent=11 // pred_fallthru
          _
        // Predicated region
        $region21: #{tpu_custom_call.1} parent=11 // pred_check
          %p248 = pneg %p201
        $region22: #{tpu_custom_call.1} parent=11 // pred_check_branch
          %250 = sbr.rel (%p248) target = $region24
        $region23: #{tpu_custom_call.1} parent=11 // pred_region
          _
        $region24: #{tpu_custom_call.1} parent=11 // pred_fallthru
          _
      $region12: #{tpu_custom_call.1} parent=5 // pred_fallthru
        _
      %p251 = scmp.lt.s32.totalorder %s22, 4
      // Predicated region
      $region25: #{tpu_custom_call.1} parent=5 // pred_check
        %p252 = pneg %p251
      $region26: #{tpu_custom_call.1} parent=5 // pred_check_branch
        %254 = sbr.rel (%p252) target = $region28
      $region27: #{tpu_custom_call.1} parent=5 // pred_region
        // Predicated region
        $region29: #{tpu_custom_call.1} parent=27 // pred_check
          %p255 = pneg %p54
        $region30: #{tpu_custom_call.1} parent=27 // pred_check_branch
          %257 = sbr.rel (%p255) target = $region32
        $region31: #{tpu_custom_call.1} parent=27 // pred_region
          %s258 = sand.u32 %s44, 1
          %s259 = scalar_lea.sflag [#allocation5], %s258
          %s260 = sand.u32 %s44, 1
          %s261 = smul.addr %s260, 256
          %s262 = scalar_lea.vmem [#allocation4], %s261
          %s263 = smul.u32 32, %s29
          %s265 = ssub.s32 4096, 4096
          %266 = vsyncadd %s259, %s265
          %s267 = smul.addr %s263, 128
          %s268 = scalar_lea.hbm %s0, %s267
          %s269 = sshll.u32 %s262, 4
          %s270 = int_to_ptr.vmem [resolvable:$true] %s269
          %275 = dma.hbm_to_vmem [thread:$0]  %s268, 4096, %s270, %s259, 128, 128, 8
        $region32: #{tpu_custom_call.1} parent=27 // pred_fallthru
          _
        // Predicated region
        $region33: #{tpu_custom_call.1} parent=27 // pred_check
          %p276 = pneg %p122
        $region34: #{tpu_custom_call.1} parent=27 // pred_check_branch
          %278 = sbr.rel (%p276) target = $region36
        $region35: #{tpu_custom_call.1} parent=27 // pred_region
          %s279 = sand.u32 %s22, 1
          %s280 = scalar_lea.sflag [#allocation8], %s279
          %s281 = sand.u32 %s112, 1
          %s282 = smul.addr %s281, 128
          %s283 = scalar_lea.vmem [#allocation7], %s282
          %s284 = smul.u32 2, %s30
          %s286 = ssub.s32 2048, 2048
          %287 = vsyncadd %s280, %s286
          %s288 = smul.addr %s284, 64
          %s289 = scalar_lea.hbm %s3, %s288
          %s290 = sshll.u32 %s283, 4
          %s291 = int_to_ptr.vmem [resolvable:$true] %s290
          %296 = dma.hbm_to_vmem [thread:$0]  %s289, 2048, %s291, %s280, 256, 128, 8
        $region36: #{tpu_custom_call.1} parent=27 // pred_fallthru
          _
        // Predicated region
        $region37: #{tpu_custom_call.1} parent=27 // pred_check
          %p297 = pneg %p148
        $region38: #{tpu_custom_call.1} parent=27 // pred_check_branch
          %299 = sbr.rel (%p297) target = $region40
        $region39: #{tpu_custom_call.1} parent=27 // pred_region
          %s300 = smul.u32 2, %s30
          %p301 = scmp.lt.s32.totalorder %s300, 3
          %s302 = scalar_select %p301, %s300, 3
          %s303 = scalar_lea.vmem %s4, %s302
          %s304 = smul.u32 2, %s30
        $region40: #{tpu_custom_call.1} parent=27 // pred_fallthru
          _
        // Predicated region
        $region41: #{tpu_custom_call.1} parent=27 // pred_check
          %p305 = pneg %p174
        $region42: #{tpu_custom_call.1} parent=27 // pred_check_branch
          %307 = sbr.rel (%p305) target = $region44
        $region43: #{tpu_custom_call.1} parent=27 // pred_region
          %s308 = sand.u32 %s22, 1
          %s309 = scalar_lea.sflag [#allocation8], %s308
          %s310 = sand.u32 %s164, 1
          %s311 = smul.addr %s310, 128
          %s312 = scalar_lea.vmem [#allocation9], %s311
          %s313 = smul.u32 32, %s30
          %s315 = ssub.s32 2048, 2048
          %316 = vsyncadd %s309, %s315
          %s317 = smul.addr %s313, 64
          %s318 = scalar_lea.hbm %s5, %s317
          %s319 = sshll.u32 %s312, 4
          %s320 = int_to_ptr.vmem [resolvable:$true] %s319
          %325 = dma.hbm_to_vmem [thread:$0]  %s318, 2048, %s320, %s309, 64, 64, 4
        $region44: #{tpu_custom_call.1} parent=27 // pred_fallthru
          _
      $region28: #{tpu_custom_call.1} parent=5 // pred_fallthru
        _
      %p326 = scmp.le.s32.totalorder 1, %s22
      %p327 = scmp.lt.s32.totalorder %s22, 5
      %p328 = pnand %p326, %p327
      %p329 = pneg %p328
      // Predicated region
      $region45: #{tpu_custom_call.1} parent=5 // pred_check
        _
      $region46: #{tpu_custom_call.1} parent=5 // pred_check_branch
        %331 = sbr.rel (%p328) target = $region48
      $region47: #{tpu_custom_call.1} parent=5 // pred_region
        %s332 = ssub.s32 %s22, 1
        %s333 = sand.u32 %s47, 1
        %s334 = scalar_lea.sflag [#allocation5], %s333
        %s335 = sand.u32 %s47, 1
        %s336 = smul.addr %s335, 256
        %s337 = scalar_lea.vmem [#allocation4], %s336
        // Predicated region
        $region49: #{tpu_custom_call.1} parent=47 // pred_check
          %p338 = pneg %p60
        $region50: #{tpu_custom_call.1} parent=47 // pred_check_branch
          %340 = sbr.rel (%p338) target = $region52
        $region51: #{tpu_custom_call.1} parent=47 // pred_region
          %341 = dma.done %s334, 4096
        $region52: #{tpu_custom_call.1} parent=47 // pred_fallthru
          _
        %s342 = sand.u32 %s27, 1
        %s343 = scalar_lea.sflag [#allocation8], %s342
        %s344 = sand.u32 %s115, 1
        %s345 = smul.addr %s344, 128
        %s346 = scalar_lea.vmem [#allocation7], %s345
        // Predicated region
        $region53: #{tpu_custom_call.1} parent=47 // pred_check
          %p347 = pneg %p128
        $region54: #{tpu_custom_call.1} parent=47 // pred_check_branch
          %349 = sbr.rel (%p347) target = $region56
        $region55: #{tpu_custom_call.1} parent=47 // pred_region
          %350 = dma.done %s343, 2048
        $region56: #{tpu_custom_call.1} parent=47 // pred_fallthru
          _
        %s351 = sand.u32 %s27, 1
        %s352 = scalar_lea.sflag [#allocation8], %s351
        %s353 = sand.u32 %s167, 1
        %s354 = smul.addr %s353, 128
        %s355 = scalar_lea.vmem [#allocation9], %s354
        // Predicated region
        $region57: #{tpu_custom_call.1} parent=47 // pred_check
          %p356 = pneg %p180
        $region58: #{tpu_custom_call.1} parent=47 // pred_check_branch
          %358 = sbr.rel (%p356) target = $region60
        $region59: #{tpu_custom_call.1} parent=47 // pred_region
          %359 = dma.done %s352, 2048
        $region60: #{tpu_custom_call.1} parent=47 // pred_fallthru
          _
        %s360 = sand.u32 %s47, 1
        %s361 = scalar_lea.sflag [#allocation5], %s360
        %s362 = sand.u32 %s47, 1
        %s363 = smul.addr %s362, 256
        %s364 = scalar_lea.vmem [#allocation4], %s363
        %p365 = pneg %p60
        %p366 = pneg %p57
        %p367 = pneg %p81
        %p368 = pneg %p78
        %p369 = pneg %p102
        %p370 = pneg %p99
        %s371 = sand.u32 %s27, 1
        %s372 = scalar_lea.sflag [#allocation8], %s371
        %s373 = sand.u32 %s115, 1
        %s374 = smul.addr %s373, 128
        %s375 = scalar_lea.vmem [#allocation7], %s374
        %p376 = pneg %p128
        %p377 = pneg %p125
        %s378 = smul.u32 2, %s32
        %p379 = scmp.lt.s32.totalorder %s378, 3
        %s380 = scalar_select %p379, %s378, 3
        %s381 = scalar_lea.vmem %s4, %s380
        %p382 = pneg %p154
        %p383 = pneg %p151
        %s384 = sand.u32 %s27, 1
        %s385 = scalar_lea.sflag [#allocation8], %s384
        %s386 = sand.u32 %s167, 1
        %s387 = smul.addr %s386, 128
        %s388 = scalar_lea.vmem [#allocation9], %s387
        %p389 = pneg %p180
        %p390 = pneg %p177
        %p391 = pneg %p201
        %p392 = pneg %p198
        %p393 = pneg %p227
        %p394 = pneg %p224
        %s395 = sand.u32 %s214, 1
        %s396 = scalar_lea.sflag [#allocation6], %s395
        %s397 = sand.u32 %s214, 1
        %s398 = smul.addr %s397, 256
        %s399 = scalar_lea.vmem [#allocation10], %s398
        %s400 = smul.u32 32, %s31
        %s401 = smul.u32 2, %s32
        %s402 = smul.u32 2, %s32
        %p403 = scmp.lt.s32.totalorder %s402, 3
        %s404 = scalar_select %p403, %s402, 3
        %s405 = scalar_lea.vmem %s4, %s404
        %s406 = smul.u32 2, %s32
        %s407 = smul.u32 32, %s32
        %s408 = smul.u32 32, %s31
        %p410 = scmp.eq.s32.totalorder %s32, 0
        // Predicated region
        $region61: #{tpu_custom_call.1} parent=47 // pred_check
          %p411 = pneg %p410
        $region62: #{tpu_custom_call.1} parent=47 // pred_check_branch
          %413 = sbr.rel (%p411) target = $region64
        $region63: #{tpu_custom_call.1} parent=47 // pred_region
          %v414 = vld [vmem:[%s337] sm:$0xff]
          %v415 = vld [vmem:[%s337 + $0x8] sm:$0xff]
          %v416 = vld [vmem:[%s337 + $0x10] sm:$0xff]
          %v417 = vld [vmem:[%s337 + $0x18] sm:$0xff]
          %v418 = vld [vmem:[%s337 + $0x20] sm:$0xff]
          %v419 = vld [vmem:[%s337 + $0x28] sm:$0xff]
          %v420 = vld [vmem:[%s337 + $0x30] sm:$0xff]
          %v421 = vld [vmem:[%s337 + $0x38] sm:$0xff]
          %v422 = vld [vmem:[%s337 + $0x40] sm:$0xff]
          %v423 = vld [vmem:[%s337 + $0x48] sm:$0xff]
          %v424 = vld [vmem:[%s337 + $0x50] sm:$0xff]
          %v425 = vld [vmem:[%s337 + $0x58] sm:$0xff]
          %v426 = vld [vmem:[%s337 + $0x60] sm:$0xff]
          %v427 = vld [vmem:[%s337 + $0x68] sm:$0xff]
          %v428 = vld [vmem:[%s337 + $0x70] sm:$0xff]
          %v429 = vld [vmem:[%s337 + $0x78] sm:$0xff]
          %v430 = vld [vmem:[%s337 + $0x80] sm:$0xff]
          %v431 = vld [vmem:[%s337 + $0x88] sm:$0xff]
          %v432 = vld [vmem:[%s337 + $0x90] sm:$0xff]
          %v433 = vld [vmem:[%s337 + $0x98] sm:$0xff]
          %v434 = vld [vmem:[%s337 + $0xa0] sm:$0xff]
          %v435 = vld [vmem:[%s337 + $0xa8] sm:$0xff]
          %v436 = vld [vmem:[%s337 + $0xb0] sm:$0xff]
          %v437 = vld [vmem:[%s337 + $0xb8] sm:$0xff]
          %v438 = vld [vmem:[%s337 + $0xc0] sm:$0xff]
          %v439 = vld [vmem:[%s337 + $0xc8] sm:$0xff]
          %v440 = vld [vmem:[%s337 + $0xd0] sm:$0xff]
          %v441 = vld [vmem:[%s337 + $0xd8] sm:$0xff]
          %v442 = vld [vmem:[%s337 + $0xe0] sm:$0xff]
          %v443 = vld [vmem:[%s337 + $0xe8] sm:$0xff]
          %v444 = vld [vmem:[%s337 + $0xf0] sm:$0xff]
          %v445 = vld [vmem:[%s337 + $0xf8] sm:$0xff]
          %446 = vadd.xlane.f32.xlu0 %v414
          %v447 = vpop.xlane.xlu0 %446
          %448 = vadd.xlane.f32.xlu0 %v415
          %v449 = vpop.xlane.xlu0 %448
          %450 = vadd.xlane.f32.xlu0 %v416
          %v451 = vpop.xlane.xlu0 %450
          %452 = vadd.xlane.f32.xlu0 %v417
          %v453 = vpop.xlane.xlu0 %452
          %454 = vadd.xlane.f32.xlu0 %v418
          %v455 = vpop.xlane.xlu0 %454
          %456 = vadd.xlane.f32.xlu0 %v419
          %v457 = vpop.xlane.xlu0 %456
          %458 = vadd.xlane.f32.xlu0 %v420
          %v459 = vpop.xlane.xlu0 %458
          %460 = vadd.xlane.f32.xlu0 %v421
          %v461 = vpop.xlane.xlu0 %460
          %462 = vadd.xlane.f32.xlu0 %v422
          %v463 = vpop.xlane.xlu0 %462
          %464 = vadd.xlane.f32.xlu0 %v423
          %v465 = vpop.xlane.xlu0 %464
          %466 = vadd.xlane.f32.xlu0 %v424
          %v467 = vpop.xlane.xlu0 %466
          %468 = vadd.xlane.f32.xlu0 %v425
          %v469 = vpop.xlane.xlu0 %468
          %470 = vadd.xlane.f32.xlu0 %v426
          %v471 = vpop.xlane.xlu0 %470
          %472 = vadd.xlane.f32.xlu0 %v427
          %v473 = vpop.xlane.xlu0 %472
          %474 = vadd.xlane.f32.xlu0 %v428
          %v475 = vpop.xlane.xlu0 %474
          %476 = vadd.xlane.f32.xlu0 %v429
          %v477 = vpop.xlane.xlu0 %476
          %478 = vadd.xlane.f32.xlu0 %v430
          %v479 = vpop.xlane.xlu0 %478
          %480 = vadd.xlane.f32.xlu0 %v431
          %v481 = vpop.xlane.xlu0 %480
          %482 = vadd.xlane.f32.xlu0 %v432
          %v483 = vpop.xlane.xlu0 %482
          %484 = vadd.xlane.f32.xlu0 %v433
          %v485 = vpop.xlane.xlu0 %484
          %486 = vadd.xlane.f32.xlu0 %v434
          %v487 = vpop.xlane.xlu0 %486
          %488 = vadd.xlane.f32.xlu0 %v435
          %v489 = vpop.xlane.xlu0 %488
          %490 = vadd.xlane.f32.xlu0 %v436
          %v491 = vpop.xlane.xlu0 %490
          %492 = vadd.xlane.f32.xlu0 %v437
          %v493 = vpop.xlane.xlu0 %492
          %494 = vadd.xlane.f32.xlu0 %v438
          %v495 = vpop.xlane.xlu0 %494
          %496 = vadd.xlane.f32.xlu0 %v439
          %v497 = vpop.xlane.xlu0 %496
          %498 = vadd.xlane.f32.xlu0 %v440
          %v499 = vpop.xlane.xlu0 %498
          %500 = vadd.xlane.f32.xlu0 %v441
          %v501 = vpop.xlane.xlu0 %500
          %502 = vadd.xlane.f32.xlu0 %v442
          %v503 = vpop.xlane.xlu0 %502
          %504 = vadd.xlane.f32.xlu0 %v443
          %v505 = vpop.xlane.xlu0 %504
          %506 = vadd.xlane.f32.xlu0 %v444
          %v507 = vpop.xlane.xlu0 %506
          %508 = vadd.xlane.f32.xlu0 %v445
          %v509 = vpop.xlane.xlu0 %508
          %v510 = vrcp.pop 128.0
          %v511 = vmul.f32 %v447, %v510
          %v512 = vmul.f32 %v449, %v510
          %v513 = vmul.f32 %v451, %v510
          %v514 = vmul.f32 %v453, %v510
          %v515 = vmul.f32 %v455, %v510
          %v516 = vmul.f32 %v457, %v510
          %v517 = vmul.f32 %v459, %v510
          %v518 = vmul.f32 %v461, %v510
          %v519 = vmul.f32 %v463, %v510
          %v520 = vmul.f32 %v465, %v510
          %v521 = vmul.f32 %v467, %v510
          %v522 = vmul.f32 %v469, %v510
          %v523 = vmul.f32 %v471, %v510
          %v524 = vmul.f32 %v473, %v510
          %v525 = vmul.f32 %v475, %v510
          %v526 = vmul.f32 %v477, %v510
          %v527 = vmul.f32 %v479, %v510
          %v528 = vmul.f32 %v481, %v510
          %v529 = vmul.f32 %v483, %v510
          %v530 = vmul.f32 %v485, %v510
          %v531 = vmul.f32 %v487, %v510
          %v532 = vmul.f32 %v489, %v510
          %v533 = vmul.f32 %v491, %v510
          %v534 = vmul.f32 %v493, %v510
          %v535 = vmul.f32 %v495, %v510
          %v536 = vmul.f32 %v497, %v510
          %v537 = vmul.f32 %v499, %v510
          %v538 = vmul.f32 %v501, %v510
          %v539 = vmul.f32 %v503, %v510
          %v540 = vmul.f32 %v505, %v510
          %v541 = vmul.f32 %v507, %v510
          %v542 = vmul.f32 %v509, %v510
          %v543 = vsub.f32 %v414, %v511
          %v544 = vsub.f32 %v415, %v512
          %v545 = vsub.f32 %v416, %v513
          %v546 = vsub.f32 %v417, %v514
          %v547 = vsub.f32 %v418, %v515
          %v548 = vsub.f32 %v419, %v516
          %v549 = vsub.f32 %v420, %v517
          %v550 = vsub.f32 %v421, %v518
          %v551 = vsub.f32 %v422, %v519
          %v552 = vsub.f32 %v423, %v520
          %v553 = vsub.f32 %v424, %v521
          %v554 = vsub.f32 %v425, %v522
          %v555 = vsub.f32 %v426, %v523
          %v556 = vsub.f32 %v427, %v524
          %v557 = vsub.f32 %v428, %v525
          %v558 = vsub.f32 %v429, %v526
          %v559 = vsub.f32 %v430, %v527
          %v560 = vsub.f32 %v431, %v528
          %v561 = vsub.f32 %v432, %v529
          %v562 = vsub.f32 %v433, %v530
          %v563 = vsub.f32 %v434, %v531
          %v564 = vsub.f32 %v435, %v532
          %v565 = vsub.f32 %v436, %v533
          %v566 = vsub.f32 %v437, %v534
          %v567 = vsub.f32 %v438, %v535
          %v568 = vsub.f32 %v439, %v536
          %v569 = vsub.f32 %v440, %v537
          %v570 = vsub.f32 %v441, %v538
          %v571 = vsub.f32 %v442, %v539
          %v572 = vsub.f32 %v443, %v540
          %v573 = vsub.f32 %v444, %v541
          %v574 = vsub.f32 %v445, %v542
          %v575 = vmul.f32 %v543, %v543
          %v576 = vmul.f32 %v544, %v544
          %v577 = vmul.f32 %v545, %v545
          %v578 = vmul.f32 %v546, %v546
          %v579 = vmul.f32 %v547, %v547
          %v580 = vmul.f32 %v548, %v548
          %v581 = vmul.f32 %v549, %v549
          %v582 = vmul.f32 %v550, %v550
          %v583 = vmul.f32 %v551, %v551
          %v584 = vmul.f32 %v552, %v552
          %v585 = vmul.f32 %v553, %v553
          %v586 = vmul.f32 %v554, %v554
          %v587 = vmul.f32 %v555, %v555
          %v588 = vmul.f32 %v556, %v556
          %v589 = vmul.f32 %v557, %v557
          %v590 = vmul.f32 %v558, %v558
          %v591 = vmul.f32 %v559, %v559
          %v592 = vmul.f32 %v560, %v560
          %v593 = vmul.f32 %v561, %v561
          %v594 = vmul.f32 %v562, %v562
          %v595 = vmul.f32 %v563, %v563
          %v596 = vmul.f32 %v564, %v564
          %v597 = vmul.f32 %v565, %v565
          %v598 = vmul.f32 %v566, %v566
          %v599 = vmul.f32 %v567, %v567
          %v600 = vmul.f32 %v568, %v568
          %v601 = vmul.f32 %v569, %v569
          %v602 = vmul.f32 %v570, %v570
          %v603 = vmul.f32 %v571, %v571
          %v604 = vmul.f32 %v572, %v572
          %v605 = vmul.f32 %v573, %v573
          %v606 = vmul.f32 %v574, %v574
          %607 = vadd.xlane.f32.xlu0 %v575
          %v608 = vpop.xlane.xlu0 %607
          %609 = vadd.xlane.f32.xlu0 %v576
          %v610 = vpop.xlane.xlu0 %609
          %611 = vadd.xlane.f32.xlu0 %v577
          %v612 = vpop.xlane.xlu0 %611
          %613 = vadd.xlane.f32.xlu0 %v578
          %v614 = vpop.xlane.xlu0 %613
          %615 = vadd.xlane.f32.xlu0 %v579
          %v616 = vpop.xlane.xlu0 %615
          %617 = vadd.xlane.f32.xlu0 %v580
          %v618 = vpop.xlane.xlu0 %617
          %619 = vadd.xlane.f32.xlu0 %v581
          %v620 = vpop.xlane.xlu0 %619
          %621 = vadd.xlane.f32.xlu0 %v582
          %v622 = vpop.xlane.xlu0 %621
          %623 = vadd.xlane.f32.xlu0 %v583
          %v624 = vpop.xlane.xlu0 %623
          %625 = vadd.xlane.f32.xlu0 %v584
          %v626 = vpop.xlane.xlu0 %625
          %627 = vadd.xlane.f32.xlu0 %v585
          %v628 = vpop.xlane.xlu0 %627
          %629 = vadd.xlane.f32.xlu0 %v586
          %v630 = vpop.xlane.xlu0 %629
          %631 = vadd.xlane.f32.xlu0 %v587
          %v632 = vpop.xlane.xlu0 %631
          %633 = vadd.xlane.f32.xlu0 %v588
          %v634 = vpop.xlane.xlu0 %633
          %635 = vadd.xlane.f32.xlu0 %v589
          %v636 = vpop.xlane.xlu0 %635
          %637 = vadd.xlane.f32.xlu0 %v590
          %v638 = vpop.xlane.xlu0 %637
          %639 = vadd.xlane.f32.xlu0 %v591
          %v640 = vpop.xlane.xlu0 %639
          %641 = vadd.xlane.f32.xlu0 %v592
          %v642 = vpop.xlane.xlu0 %641
          %643 = vadd.xlane.f32.xlu0 %v593
          %v644 = vpop.xlane.xlu0 %643
          %645 = vadd.xlane.f32.xlu0 %v594
          %v646 = vpop.xlane.xlu0 %645
          %647 = vadd.xlane.f32.xlu0 %v595
          %v648 = vpop.xlane.xlu0 %647
          %649 = vadd.xlane.f32.xlu0 %v596
          %v650 = vpop.xlane.xlu0 %649
          %651 = vadd.xlane.f32.xlu0 %v597
          %v652 = vpop.xlane.xlu0 %651
          %653 = vadd.xlane.f32.xlu0 %v598
          %v654 = vpop.xlane.xlu0 %653
          %655 = vadd.xlane.f32.xlu0 %v599
          %v656 = vpop.xlane.xlu0 %655
          %657 = vadd.xlane.f32.xlu0 %v600
          %v658 = vpop.xlane.xlu0 %657
          %659 = vadd.xlane.f32.xlu0 %v601
          %v660 = vpop.xlane.xlu0 %659
          %661 = vadd.xlane.f32.xlu0 %v602
          %v662 = vpop.xlane.xlu0 %661
          %663 = vadd.xlane.f32.xlu0 %v603
          %v664 = vpop.xlane.xlu0 %663
          %665 = vadd.xlane.f32.xlu0 %v604
          %v666 = vpop.xlane.xlu0 %665
          %667 = vadd.xlane.f32.xlu0 %v605
          %v668 = vpop.xlane.xlu0 %667
          %669 = vadd.xlane.f32.xlu0 %v606
          %v670 = vpop.xlane.xlu0 %669
          %v671 = vmul.f32 %v608, %v510
          %v672 = vmul.f32 %v610, %v510
          %v673 = vmul.f32 %v612, %v510
          %v674 = vmul.f32 %v614, %v510
          %v675 = vmul.f32 %v616, %v510
          %v676 = vmul.f32 %v618, %v510
          %v677 = vmul.f32 %v620, %v510
          %v678 = vmul.f32 %v622, %v510
          %v679 = vmul.f32 %v624, %v510
          %v680 = vmul.f32 %v626, %v510
          %v681 = vmul.f32 %v628, %v510
          %v682 = vmul.f32 %v630, %v510
          %v683 = vmul.f32 %v632, %v510
          %v684 = vmul.f32 %v634, %v510
          %v685 = vmul.f32 %v636, %v510
          %v686 = vmul.f32 %v638, %v510
          %v687 = vmul.f32 %v640, %v510
          %v688 = vmul.f32 %v642, %v510
          %v689 = vmul.f32 %v644, %v510
          %v690 = vmul.f32 %v646, %v510
          %v691 = vmul.f32 %v648, %v510
          %v692 = vmul.f32 %v650, %v510
          %v693 = vmul.f32 %v652, %v510
          %v694 = vmul.f32 %v654, %v510
          %v695 = vmul.f32 %v656, %v510
          %v696 = vmul.f32 %v658, %v510
          %v697 = vmul.f32 %v660, %v510
          %v698 = vmul.f32 %v662, %v510
          %v699 = vmul.f32 %v664, %v510
          %v700 = vmul.f32 %v666, %v510
          %v701 = vmul.f32 %v668, %v510
          %v702 = vmul.f32 %v670, %v510
          %v703 = vadd.f32 %v671, 1e-05
          %v704 = vadd.f32 %v672, 1e-05
          %v705 = vadd.f32 %v673, 1e-05
          %v706 = vadd.f32 %v674, 1e-05
          %v707 = vadd.f32 %v675, 1e-05
          %v708 = vadd.f32 %v676, 1e-05
          %v709 = vadd.f32 %v677, 1e-05
          %v710 = vadd.f32 %v678, 1e-05
          %v711 = vadd.f32 %v679, 1e-05
          %v712 = vadd.f32 %v680, 1e-05
          %v713 = vadd.f32 %v681, 1e-05
          %v714 = vadd.f32 %v682, 1e-05
          %v715 = vadd.f32 %v683, 1e-05
          %v716 = vadd.f32 %v684, 1e-05
          %v717 = vadd.f32 %v685, 1e-05
          %v718 = vadd.f32 %v686, 1e-05
          %v719 = vadd.f32 %v687, 1e-05
          %v720 = vadd.f32 %v688, 1e-05
          %v721 = vadd.f32 %v689, 1e-05
          %v722 = vadd.f32 %v690, 1e-05
          %v723 = vadd.f32 %v691, 1e-05
          %v724 = vadd.f32 %v692, 1e-05
          %v725 = vadd.f32 %v693, 1e-05
          %v726 = vadd.f32 %v694, 1e-05
          %v727 = vadd.f32 %v695, 1e-05
          %v728 = vadd.f32 %v696, 1e-05
          %v729 = vadd.f32 %v697, 1e-05
          %v730 = vadd.f32 %v698, 1e-05
          %v731 = vadd.f32 %v699, 1e-05
          %v732 = vadd.f32 %v700, 1e-05
          %v733 = vadd.f32 %v701, 1e-05
          %v734 = vadd.f32 %v702, 1e-05
          %v735 = vrsqrt.pop %v703
          %v736 = vrsqrt.pop %v704
          %v737 = vrsqrt.pop %v705
          %v738 = vrsqrt.pop %v706
          %v739 = vrsqrt.pop %v707
          %v740 = vrsqrt.pop %v708
          %v741 = vrsqrt.pop %v709
          %v742 = vrsqrt.pop %v710
          %v743 = vrsqrt.pop %v711
          %v744 = vrsqrt.pop %v712
          %v745 = vrsqrt.pop %v713
          %v746 = vrsqrt.pop %v714
          %v747 = vrsqrt.pop %v715
          %v748 = vrsqrt.pop %v716
          %v749 = vrsqrt.pop %v717
          %v750 = vrsqrt.pop %v718
          %v751 = vrsqrt.pop %v719
          %v752 = vrsqrt.pop %v720
          %v753 = vrsqrt.pop %v721
          %v754 = vrsqrt.pop %v722
          %v755 = vrsqrt.pop %v723
          %v756 = vrsqrt.pop %v724
          %v757 = vrsqrt.pop %v725
          %v758 = vrsqrt.pop %v726
          %v759 = vrsqrt.pop %v727
          %v760 = vrsqrt.pop %v728
          %v761 = vrsqrt.pop %v729
          %v762 = vrsqrt.pop %v730
          %v763 = vrsqrt.pop %v731
          %v764 = vrsqrt.pop %v732
          %v765 = vrsqrt.pop %v733
          %v766 = vrsqrt.pop %v734
          %v767 = vmul.f32 %v543, %v735
          %v768 = vmul.f32 %v544, %v736
          %v769 = vmul.f32 %v545, %v737
          %v770 = vmul.f32 %v546, %v738
          %v771 = vmul.f32 %v547, %v739
          %v772 = vmul.f32 %v548, %v740
          %v773 = vmul.f32 %v549, %v741
          %v774 = vmul.f32 %v550, %v742
          %v775 = vmul.f32 %v551, %v743
          %v776 = vmul.f32 %v552, %v744
          %v777 = vmul.f32 %v553, %v745
          %v778 = vmul.f32 %v554, %v746
          %v779 = vmul.f32 %v555, %v747
          %v780 = vmul.f32 %v556, %v748
          %v781 = vmul.f32 %v557, %v749
          %v782 = vmul.f32 %v558, %v750
          %v783 = vmul.f32 %v559, %v751
          %v784 = vmul.f32 %v560, %v752
          %v785 = vmul.f32 %v561, %v753
          %v786 = vmul.f32 %v562, %v754
          %v787 = vmul.f32 %v563, %v755
          %v788 = vmul.f32 %v564, %v756
          %v789 = vmul.f32 %v565, %v757
          %v790 = vmul.f32 %v566, %v758
          %v791 = vmul.f32 %v567, %v759
          %v792 = vmul.f32 %v568, %v760
          %v793 = vmul.f32 %v569, %v761
          %v794 = vmul.f32 %v570, %v762
          %v795 = vmul.f32 %v571, %v763
          %v796 = vmul.f32 %v572, %v764
          %v797 = vmul.f32 %v573, %v765
          %v798 = vmul.f32 %v574, %v766
          %v799 = vld [vmem:[%s1] sm:$0x1]
          %v801 = vlaneseq
          %v802 = vshrl.u32 %v801, 7
          %v803 = vsub.s32 0, %v802
          %v804 = vrot.slane %v799, %v803
          %v806 = vmul.f32 %v767, %v804
          %v807 = vmul.f32 %v768, %v804
          %v808 = vmul.f32 %v769, %v804
          %v809 = vmul.f32 %v770, %v804
          %v810 = vmul.f32 %v771, %v804
          %v811 = vmul.f32 %v772, %v804
          %v812 = vmul.f32 %v773, %v804
          %v813 = vmul.f32 %v774, %v804
          %v814 = vmul.f32 %v775, %v804
          %v815 = vmul.f32 %v776, %v804
          %v816 = vmul.f32 %v777, %v804
          %v817 = vmul.f32 %v778, %v804
          %v818 = vmul.f32 %v779, %v804
          %v819 = vmul.f32 %v780, %v804
          %v820 = vmul.f32 %v781, %v804
          %v821 = vmul.f32 %v782, %v804
          %v822 = vmul.f32 %v783, %v804
          %v823 = vmul.f32 %v784, %v804
          %v824 = vmul.f32 %v785, %v804
          %v825 = vmul.f32 %v786, %v804
          %v826 = vmul.f32 %v787, %v804
          %v827 = vmul.f32 %v788, %v804
          %v828 = vmul.f32 %v789, %v804
          %v829 = vmul.f32 %v790, %v804
          %v830 = vmul.f32 %v791, %v804
          %v831 = vmul.f32 %v792, %v804
          %v832 = vmul.f32 %v793, %v804
          %v833 = vmul.f32 %v794, %v804
          %v834 = vmul.f32 %v795, %v804
          %v835 = vmul.f32 %v796, %v804
          %v836 = vmul.f32 %v797, %v804
          %v837 = vmul.f32 %v798, %v804
          %v838 = vld [vmem:[%s2] sm:$0x1]
          %v840 = vlaneseq
          %v841 = vshrl.u32 %v840, 7
          %v842 = vsub.s32 0, %v841
          %v843 = vrot.slane %v838, %v842
          %v845 = vadd.f32 %v806, %v843
          %v846 = vadd.f32 %v807, %v843
          %v847 = vadd.f32 %v808, %v843
          %v848 = vadd.f32 %v809, %v843
          %v849 = vadd.f32 %v810, %v843
          %v850 = vadd.f32 %v811, %v843
          %v851 = vadd.f32 %v812, %v843
          %v852 = vadd.f32 %v813, %v843
          %v853 = vadd.f32 %v814, %v843
          %v854 = vadd.f32 %v815, %v843
          %v855 = vadd.f32 %v816, %v843
          %v856 = vadd.f32 %v817, %v843
          %v857 = vadd.f32 %v818, %v843
          %v858 = vadd.f32 %v819, %v843
          %v859 = vadd.f32 %v820, %v843
          %v860 = vadd.f32 %v821, %v843
          %v861 = vadd.f32 %v822, %v843
          %v862 = vadd.f32 %v823, %v843
          %v863 = vadd.f32 %v824, %v843
          %v864 = vadd.f32 %v825, %v843
          %v865 = vadd.f32 %v826, %v843
          %v866 = vadd.f32 %v827, %v843
          %v867 = vadd.f32 %v828, %v843
          %v868 = vadd.f32 %v829, %v843
          %v869 = vadd.f32 %v830, %v843
          %v870 = vadd.f32 %v831, %v843
          %v871 = vadd.f32 %v832, %v843
          %v872 = vadd.f32 %v833, %v843
          %v873 = vadd.f32 %v834, %v843
          %v874 = vadd.f32 %v835, %v843
          %v875 = vadd.f32 %v836, %v843
          %v876 = vadd.f32 %v837, %v843
          %v877 = vpack.c.bf16 %v846, %v845
          %v878 = vpack.c.bf16 %v848, %v847
          %v879 = vpack.c.bf16 %v850, %v849
          %v880 = vpack.c.bf16 %v852, %v851
          %v881 = vpack.c.bf16 %v854, %v853
          %v882 = vpack.c.bf16 %v856, %v855
          %v883 = vpack.c.bf16 %v858, %v857
          %v884 = vpack.c.bf16 %v860, %v859
          %v885 = vpack.c.bf16 %v862, %v861
          %v886 = vpack.c.bf16 %v864, %v863
          %v887 = vpack.c.bf16 %v866, %v865
          %v888 = vpack.c.bf16 %v868, %v867
          %v889 = vpack.c.bf16 %v870, %v869
          %v890 = vpack.c.bf16 %v872, %v871
          %v891 = vpack.c.bf16 %v874, %v873
          %v892 = vpack.c.bf16 %v876, %v875
          %v909 = vunpack.c.l.b16 %v877
          %v910 = vunpack.c.h.b16 %v877
          %v911 = vunpack.c.l.b16 %v878
          %v912 = vunpack.c.h.b16 %v878
          %v913 = vunpack.c.l.b16 %v879
          %v914 = vunpack.c.h.b16 %v879
          %v915 = vunpack.c.l.b16 %v880
          %v916 = vunpack.c.h.b16 %v880
          %v917 = vunpack.c.l.b16 %v881
          %v918 = vunpack.c.h.b16 %v881
          %v919 = vunpack.c.l.b16 %v882
          %v920 = vunpack.c.h.b16 %v882
          %v921 = vunpack.c.l.b16 %v883
          %v922 = vunpack.c.h.b16 %v883
          %v923 = vunpack.c.l.b16 %v884
          %v924 = vunpack.c.h.b16 %v884
          %v925 = vunpack.c.l.b16 %v885
          %v926 = vunpack.c.h.b16 %v885
          %v927 = vunpack.c.l.b16 %v886
          %v928 = vunpack.c.h.b16 %v886
          %v929 = vunpack.c.l.b16 %v887
          %v930 = vunpack.c.h.b16 %v887
          %v931 = vunpack.c.l.b16 %v888
          %v932 = vunpack.c.h.b16 %v888
          %v933 = vunpack.c.l.b16 %v889
          %v934 = vunpack.c.h.b16 %v889
          %v935 = vunpack.c.l.b16 %v890
          %v936 = vunpack.c.h.b16 %v890
          %v937 = vunpack.c.l.b16 %v891
          %v938 = vunpack.c.h.b16 %v891
          %v939 = vunpack.c.l.b16 %v892
          %v940 = vunpack.c.h.b16 %v892
          %v941 = vpack.c.b16 %v909, %v909
          %v942 = vpack.c.b16 %v910, %v910
          %v943 = vpack.c.b16 %v911, %v911
          %v944 = vpack.c.b16 %v912, %v912
          %v945 = vpack.c.b16 %v913, %v913
          %v946 = vpack.c.b16 %v914, %v914
          %v947 = vpack.c.b16 %v915, %v915
          %v948 = vpack.c.b16 %v916, %v916
          %v949 = vpack.c.b16 %v917, %v917
          %v950 = vpack.c.b16 %v918, %v918
          %v951 = vpack.c.b16 %v919, %v919
          %v952 = vpack.c.b16 %v920, %v920
          %v953 = vpack.c.b16 %v921, %v921
          %v954 = vpack.c.b16 %v922, %v922
          %v955 = vpack.c.b16 %v923, %v923
          %v956 = vpack.c.b16 %v924, %v924
          %v957 = vpack.c.b16 %v925, %v925
          %v958 = vpack.c.b16 %v926, %v926
          %v959 = vpack.c.b16 %v927, %v927
          %v960 = vpack.c.b16 %v928, %v928
          %v961 = vpack.c.b16 %v929, %v929
          %v962 = vpack.c.b16 %v930, %v930
          %v963 = vpack.c.b16 %v931, %v931
          %v964 = vpack.c.b16 %v932, %v932
          %v965 = vpack.c.b16 %v933, %v933
          %v966 = vpack.c.b16 %v934, %v934
          %v967 = vpack.c.b16 %v935, %v935
          %v968 = vpack.c.b16 %v936, %v936
          %v969 = vpack.c.b16 %v937, %v937
          %v970 = vpack.c.b16 %v938, %v938
          %v971 = vpack.c.b16 %v939, %v939
          %v972 = vpack.c.b16 %v940, %v940
          %1005 = vst [vmem:[#allocation2] sm:$0xf] %v941
          %1006 = vst [vmem:[#allocation2 + $0x4] sm:$0xf] %v942
          %1007 = vst [vmem:[#allocation2 + $0x8] sm:$0xf] %v943
          %1008 = vst [vmem:[#allocation2 + $0xc] sm:$0xf] %v944
          %1009 = vst [vmem:[#allocation2 + $0x10] sm:$0xf] %v945
          %1010 = vst [vmem:[#allocation2 + $0x14] sm:$0xf] %v946
          %1011 = vst [vmem:[#allocation2 + $0x18] sm:$0xf] %v947
          %1012 = vst [vmem:[#allocation2 + $0x1c] sm:$0xf] %v948
          %1013 = vst [vmem:[#allocation2 + $0x20] sm:$0xf] %v949
          %1014 = vst [vmem:[#allocation2 + $0x24] sm:$0xf] %v950
          %1015 = vst [vmem:[#allocation2 + $0x28] sm:$0xf] %v951
          %1016 = vst [vmem:[#allocation2 + $0x2c] sm:$0xf] %v952
          %1017 = vst [vmem:[#allocation2 + $0x30] sm:$0xf] %v953
          %1018 = vst [vmem:[#allocation2 + $0x34] sm:$0xf] %v954
          %1019 = vst [vmem:[#allocation2 + $0x38] sm:$0xf] %v955
          %1020 = vst [vmem:[#allocation2 + $0x3c] sm:$0xf] %v956
          %1021 = vst [vmem:[#allocation2 + $0x40] sm:$0xf] %v957
          %1022 = vst [vmem:[#allocation2 + $0x44] sm:$0xf] %v958
          %1023 = vst [vmem:[#allocation2 + $0x48] sm:$0xf] %v959
          %1024 = vst [vmem:[#allocation2 + $0x4c] sm:$0xf] %v960
          %1025 = vst [vmem:[#allocation2 + $0x50] sm:$0xf] %v961
          %1026 = vst [vmem:[#allocation2 + $0x54] sm:$0xf] %v962
          %1027 = vst [vmem:[#allocation2 + $0x58] sm:$0xf] %v963
          %1028 = vst [vmem:[#allocation2 + $0x5c] sm:$0xf] %v964
          %1029 = vst [vmem:[#allocation2 + $0x60] sm:$0xf] %v965
          %1030 = vst [vmem:[#allocation2 + $0x64] sm:$0xf] %v966
          %1031 = vst [vmem:[#allocation2 + $0x68] sm:$0xf] %v967
          %1032 = vst [vmem:[#allocation2 + $0x6c] sm:$0xf] %v968
          %1033 = vst [vmem:[#allocation2 + $0x70] sm:$0xf] %v969
          %1034 = vst [vmem:[#allocation2 + $0x74] sm:$0xf] %v970
          %1035 = vst [vmem:[#allocation2 + $0x78] sm:$0xf] %v971
          %1036 = vst [vmem:[#allocation2 + $0x7c] sm:$0xf] %v972
          %1037 = vst [vmem:[#allocation3] sm:$0xff] 0.0
          %1038 = vst [vmem:[#allocation3 + $0x8] sm:$0xff] 0.0
          %1039 = vst [vmem:[#allocation3 + $0x10] sm:$0xff] 0.0
          %1040 = vst [vmem:[#allocation3 + $0x18] sm:$0xff] 0.0
          %1041 = vst [vmem:[#allocation3 + $0x20] sm:$0xff] 0.0
          %1042 = vst [vmem:[#allocation3 + $0x28] sm:$0xff] 0.0
          %1043 = vst [vmem:[#allocation3 + $0x30] sm:$0xff] 0.0
          %1044 = vst [vmem:[#allocation3 + $0x38] sm:$0xff] 0.0
          %1045 = vst [vmem:[#allocation3 + $0x40] sm:$0xff] 0.0
          %1046 = vst [vmem:[#allocation3 + $0x48] sm:$0xff] 0.0
          %1047 = vst [vmem:[#allocation3 + $0x50] sm:$0xff] 0.0
          %1048 = vst [vmem:[#allocation3 + $0x58] sm:$0xff] 0.0
          %1049 = vst [vmem:[#allocation3 + $0x60] sm:$0xff] 0.0
          %1050 = vst [vmem:[#allocation3 + $0x68] sm:$0xff] 0.0
          %1051 = vst [vmem:[#allocation3 + $0x70] sm:$0xff] 0.0
          %1052 = vst [vmem:[#allocation3 + $0x78] sm:$0xff] 0.0
          %1053 = vst [vmem:[#allocation3 + $0x80] sm:$0xff] 0.0
          %1054 = vst [vmem:[#allocation3 + $0x88] sm:$0xff] 0.0
          %1055 = vst [vmem:[#allocation3 + $0x90] sm:$0xff] 0.0
          %1056 = vst [vmem:[#allocation3 + $0x98] sm:$0xff] 0.0
          %1057 = vst [vmem:[#allocation3 + $0xa0] sm:$0xff] 0.0
          %1058 = vst [vmem:[#allocation3 + $0xa8] sm:$0xff] 0.0
          %1059 = vst [vmem:[#allocation3 + $0xb0] sm:$0xff] 0.0
          %1060 = vst [vmem:[#allocation3 + $0xb8] sm:$0xff] 0.0
          %1061 = vst [vmem:[#allocation3 + $0xc0] sm:$0xff] 0.0
          %1062 = vst [vmem:[#allocation3 + $0xc8] sm:$0xff] 0.0
          %1063 = vst [vmem:[#allocation3 + $0xd0] sm:$0xff] 0.0
          %1064 = vst [vmem:[#allocation3 + $0xd8] sm:$0xff] 0.0
          %1065 = vst [vmem:[#allocation3 + $0xe0] sm:$0xff] 0.0
          %1066 = vst [vmem:[#allocation3 + $0xe8] sm:$0xff] 0.0
          %1067 = vst [vmem:[#allocation3 + $0xf0] sm:$0xff] 0.0
          %1068 = vst [vmem:[#allocation3 + $0xf8] sm:$0xff] 0.0
        $region64: #{tpu_custom_call.1} parent=47 // pred_fallthru
          _
        %v1069 = vld [vmem:[#allocation2] sm:$0xf]
        %v1070 = vld [vmem:[#allocation2 + $0x4] sm:$0xf]
        %v1071 = vld [vmem:[#allocation2 + $0x8] sm:$0xf]
        %v1072 = vld [vmem:[#allocation2 + $0xc] sm:$0xf]
        %v1073 = vld [vmem:[#allocation2 + $0x10] sm:$0xf]
        %v1074 = vld [vmem:[#allocation2 + $0x14] sm:$0xf]
        %v1075 = vld [vmem:[#allocation2 + $0x18] sm:$0xf]
        %v1076 = vld [vmem:[#allocation2 + $0x1c] sm:$0xf]
        %v1077 = vld [vmem:[#allocation2 + $0x20] sm:$0xf]
        %v1078 = vld [vmem:[#allocation2 + $0x24] sm:$0xf]
        %v1079 = vld [vmem:[#allocation2 + $0x28] sm:$0xf]
        %v1080 = vld [vmem:[#allocation2 + $0x2c] sm:$0xf]
        %v1081 = vld [vmem:[#allocation2 + $0x30] sm:$0xf]
        %v1082 = vld [vmem:[#allocation2 + $0x34] sm:$0xf]
        %v1083 = vld [vmem:[#allocation2 + $0x38] sm:$0xf]
        %v1084 = vld [vmem:[#allocation2 + $0x3c] sm:$0xf]
        %v1085 = vld [vmem:[#allocation2 + $0x40] sm:$0xf]
        %v1086 = vld [vmem:[#allocation2 + $0x44] sm:$0xf]
        %v1087 = vld [vmem:[#allocation2 + $0x48] sm:$0xf]
        %v1088 = vld [vmem:[#allocation2 + $0x4c] sm:$0xf]
        %v1089 = vld [vmem:[#allocation2 + $0x50] sm:$0xf]
        %v1090 = vld [vmem:[#allocation2 + $0x54] sm:$0xf]
        %v1091 = vld [vmem:[#allocation2 + $0x58] sm:$0xf]
        %v1092 = vld [vmem:[#allocation2 + $0x5c] sm:$0xf]
        %v1093 = vld [vmem:[#allocation2 + $0x60] sm:$0xf]
        %v1094 = vld [vmem:[#allocation2 + $0x64] sm:$0xf]
        %v1095 = vld [vmem:[#allocation2 + $0x68] sm:$0xf]
        %v1096 = vld [vmem:[#allocation2 + $0x6c] sm:$0xf]
        %v1097 = vld [vmem:[#allocation2 + $0x70] sm:$0xf]
        %v1098 = vld [vmem:[#allocation2 + $0x74] sm:$0xf]
        %v1099 = vld [vmem:[#allocation2 + $0x78] sm:$0xf]
        %v1100 = vld [vmem:[#allocation2 + $0x7c] sm:$0xf]
        %v1101 = vld [vmem:[%s346] sm:$0xff]
        %v1102 = vld [vmem:[%s346 + $0x8] sm:$0xff]
        %v1103 = vld [vmem:[%s346 + $0x10] sm:$0xff]
        %v1104 = vld [vmem:[%s346 + $0x18] sm:$0xff]
        %v1105 = vld [vmem:[%s346 + $0x20] sm:$0xff]
        %v1106 = vld [vmem:[%s346 + $0x28] sm:$0xff]
        %v1107 = vld [vmem:[%s346 + $0x30] sm:$0xff]
        %v1108 = vld [vmem:[%s346 + $0x38] sm:$0xff]
        %v1109 = vld [vmem:[%s346 + $0x40] sm:$0xff]
        %v1110 = vld [vmem:[%s346 + $0x48] sm:$0xff]
        %v1111 = vld [vmem:[%s346 + $0x50] sm:$0xff]
        %v1112 = vld [vmem:[%s346 + $0x58] sm:$0xff]
        %v1113 = vld [vmem:[%s346 + $0x60] sm:$0xff]
        %v1114 = vld [vmem:[%s346 + $0x68] sm:$0xff]
        %v1115 = vld [vmem:[%s346 + $0x70] sm:$0xff]
        %v1116 = vld [vmem:[%s346 + $0x78] sm:$0xff]
        %v1117 = vld [vmem:[%s405] sm:$0x3]
        %v1119 = vlaneseq
        %v1120 = vshrl.u32 %v1119, 7
        %v1121 = vsub.s32 0, %v1120
        %v1122 = vrot.slane %v1117, %v1121
        %v1123 = vlaneseq
        %v1124 = vshrl.u32 %v1123, 7
        %v1125 = vsub.s32 1, %v1124
        %v1126 = vrot.slane %v1117, %v1125
        %v1161 = vunpack.c.l.b16 %v1069
        %v1162 = vunpack.c.l.b16 %v1070
        %v1163 = vunpack.c.l.b16 %v1071
        %v1164 = vunpack.c.l.b16 %v1072
        %v1165 = vunpack.c.l.b16 %v1073
        %v1166 = vunpack.c.l.b16 %v1074
        %v1167 = vunpack.c.l.b16 %v1075
        %v1168 = vunpack.c.l.b16 %v1076
        %v1169 = vunpack.c.l.b16 %v1077
        %v1170 = vunpack.c.l.b16 %v1078
        %v1171 = vunpack.c.l.b16 %v1079
        %v1172 = vunpack.c.l.b16 %v1080
        %v1173 = vunpack.c.l.b16 %v1081
        %v1174 = vunpack.c.l.b16 %v1082
        %v1175 = vunpack.c.l.b16 %v1083
        %v1176 = vunpack.c.l.b16 %v1084
        %v1177 = vunpack.c.l.b16 %v1085
        %v1178 = vunpack.c.l.b16 %v1086
        %v1179 = vunpack.c.l.b16 %v1087
        %v1180 = vunpack.c.l.b16 %v1088
        %v1181 = vunpack.c.l.b16 %v1089
        %v1182 = vunpack.c.l.b16 %v1090
        %v1183 = vunpack.c.l.b16 %v1091
        %v1184 = vunpack.c.l.b16 %v1092
        %v1185 = vunpack.c.l.b16 %v1093
        %v1186 = vunpack.c.l.b16 %v1094
        %v1187 = vunpack.c.l.b16 %v1095
        %v1188 = vunpack.c.l.b16 %v1096
        %v1189 = vunpack.c.l.b16 %v1097
        %v1190 = vunpack.c.l.b16 %v1098
        %v1191 = vunpack.c.l.b16 %v1099
        %v1192 = vunpack.c.l.b16 %v1100
        %v1193 = vpack.c.b16 %v1162, %v1161
        %v1194 = vpack.c.b16 %v1164, %v1163
        %v1195 = vpack.c.b16 %v1166, %v1165
        %v1196 = vpack.c.b16 %v1168, %v1167
        %v1197 = vpack.c.b16 %v1170, %v1169
        %v1198 = vpack.c.b16 %v1172, %v1171
        %v1199 = vpack.c.b16 %v1174, %v1173
        %v1200 = vpack.c.b16 %v1176, %v1175
        %v1201 = vpack.c.b16 %v1178, %v1177
        %v1202 = vpack.c.b16 %v1180, %v1179
        %v1203 = vpack.c.b16 %v1182, %v1181
        %v1204 = vpack.c.b16 %v1184, %v1183
        %v1205 = vpack.c.b16 %v1186, %v1185
        %v1206 = vpack.c.b16 %v1188, %v1187
        %v1207 = vpack.c.b16 %v1190, %v1189
        %v1208 = vpack.c.b16 %v1192, %v1191
        %v1241 = vunpack.c.l.b16 %v1101
        %v1242 = vunpack.c.h.b16 %v1101
        %v1243 = vunpack.c.l.b16 %v1102
        %v1244 = vunpack.c.h.b16 %v1102
        %v1245 = vunpack.c.l.b16 %v1103
        %v1246 = vunpack.c.h.b16 %v1103
        %v1247 = vunpack.c.l.b16 %v1104
        %v1248 = vunpack.c.h.b16 %v1104
        %v1249 = vunpack.c.l.b16 %v1105
        %v1250 = vunpack.c.h.b16 %v1105
        %v1251 = vunpack.c.l.b16 %v1106
        %v1252 = vunpack.c.h.b16 %v1106
        %v1253 = vunpack.c.l.b16 %v1107
        %v1254 = vunpack.c.h.b16 %v1107
        %v1255 = vunpack.c.l.b16 %v1108
        %v1256 = vunpack.c.h.b16 %v1108
        %v1257 = vunpack.c.l.b16 %v1109
        %v1258 = vunpack.c.h.b16 %v1109
        %v1259 = vunpack.c.l.b16 %v1110
        %v1260 = vunpack.c.h.b16 %v1110
        %v1261 = vunpack.c.l.b16 %v1111
        %v1262 = vunpack.c.h.b16 %v1111
        %v1263 = vunpack.c.l.b16 %v1112
        %v1264 = vunpack.c.h.b16 %v1112
        %v1265 = vunpack.c.l.b16 %v1113
        %v1266 = vunpack.c.h.b16 %v1113
        %v1267 = vunpack.c.l.b16 %v1114
        %v1268 = vunpack.c.h.b16 %v1114
        %v1269 = vunpack.c.l.b16 %v1115
        %v1270 = vunpack.c.h.b16 %v1115
        %v1271 = vunpack.c.l.b16 %v1116
        %v1272 = vunpack.c.h.b16 %v1116
        %v1273 = vpack.c.b16 %v1243, %v1241
        %v1274 = vpack.c.b16 %v1244, %v1242
        %v1275 = vpack.c.b16 %v1247, %v1245
        %v1276 = vpack.c.b16 %v1248, %v1246
        %v1277 = vpack.c.b16 %v1251, %v1249
        %v1278 = vpack.c.b16 %v1252, %v1250
        %v1279 = vpack.c.b16 %v1255, %v1253
        %v1280 = vpack.c.b16 %v1256, %v1254
        %v1281 = vpack.c.b16 %v1259, %v1257
        %v1282 = vpack.c.b16 %v1260, %v1258
        %v1283 = vpack.c.b16 %v1263, %v1261
        %v1284 = vpack.c.b16 %v1264, %v1262
        %v1285 = vpack.c.b16 %v1267, %v1265
        %v1286 = vpack.c.b16 %v1268, %v1266
        %v1287 = vpack.c.b16 %v1271, %v1269
        %v1288 = vpack.c.b16 %v1272, %v1270
        %1305 = vmatprep.subr.bf16.mxu0 %v1288
        %1306 = vmatpush1.bf16.msra.mxu0 %v1287
        %1307 = vmatprep.subr.bf16.mxu0 %v1286
        %1308 = vmatpush1.bf16.msra.mxu0 %v1285
        %1309 = vmatprep.subr.bf16.mxu0 %v1284
        %1310 = vmatpush1.bf16.msra.mxu0 %v1283
        %1311 = vmatprep.subr.bf16.mxu0 %v1282
        %1312 = vmatpush1.bf16.msra.mxu0 %v1281
        %1313 = vmatprep.subr.bf16.mxu0 %v1280
        %1314 = vmatpush1.bf16.msra.mxu0 %v1279
        %1315 = vmatprep.subr.bf16.mxu0 %v1278
        %1316 = vmatpush1.bf16.msra.mxu0 %v1277
        %1317 = vmatprep.subr.bf16.mxu0 %v1276
        %1318 = vmatpush1.bf16.msra.mxu0 %v1275
        %1319 = vmatprep.subr.bf16.mxu0 %v1274
        %1320 = vmatpush1.bf16.msra.mxu0 %v1273
        %1321 = vmatprep.subr.bf16.mxu0 0
        %1322 = vmatpush2.bf16.msra.mxu0 0
        %1323 = vmatprep.subr.bf16.mxu0 0
        %1324 = vmatpush2.bf16.msra.mxu0 0
        %1325 = vmatprep.subr.bf16.mxu0 0
        %1326 = vmatpush2.bf16.msra.mxu0 0
        %1327 = vmatprep.subr.bf16.mxu0 0
        %1328 = vmatpush2.bf16.msra.mxu0 0
        %1329 = vmatprep.subr.bf16.mxu0 0
        %1330 = vmatpush2.bf16.msra.mxu0 0
        %1331 = vmatprep.subr.bf16.mxu0 0
        %1332 = vmatpush2.bf16.msra.mxu0 0
        %1333 = vmatprep.subr.bf16.mxu0 0
        %1334 = vmatpush2.bf16.msra.mxu0 0
        %1335 = vmatprep.subr.bf16.mxu0 0
        %1336 = vmatpush2.bf16.msra.mxu0 0
        %1337 = vmatprep.mubr.bf16.mxu0 0
        %1338 = vmatmul.mubr.bf16.gmra.mxu0 %v1193
        %v1339 = vpop.f32.mrf.mxu0
        %v1340 = vadd.f32 %v1122, %v1339
        %v1341 = vpop.f32.mrf.mxu0
        %v1342 = vadd.f32 %v1126, %v1341
        %v1343 = vpop.f32.mrf.mxu0
        %v1344 = vadd.f32 %v1122, %v1343
        %v1345 = vpop.f32.mrf.mxu0
        %v1346 = vadd.f32 %v1126, %v1345
        %1347 = vmatprep.mubr.bf16.mxu0 0
        %1348 = vmatmul.mubr.bf16.gmra.mxu0 %v1194
        %v1349 = vpop.f32.mrf.mxu0
        %v1350 = vadd.f32 %v1122, %v1349
        %v1351 = vpop.f32.mrf.mxu0
        %v1352 = vadd.f32 %v1126, %v1351
        %v1353 = vpop.f32.mrf.mxu0
        %v1354 = vadd.f32 %v1122, %v1353
        %v1355 = vpop.f32.mrf.mxu0
        %v1356 = vadd.f32 %v1126, %v1355
        %1357 = vmatprep.mubr.bf16.mxu0 0
        %1358 = vmatmul.mubr.bf16.gmra.mxu0 %v1195
        %v1359 = vpop.f32.mrf.mxu0
        %v1360 = vadd.f32 %v1122, %v1359
        %v1361 = vpop.f32.mrf.mxu0
        %v1362 = vadd.f32 %v1126, %v1361
        %v1363 = vpop.f32.mrf.mxu0
        %v1364 = vadd.f32 %v1122, %v1363
        %v1365 = vpop.f32.mrf.mxu0
        %v1366 = vadd.f32 %v1126, %v1365
        %1367 = vmatprep.mubr.bf16.mxu0 0
        %1368 = vmatmul.mubr.bf16.gmra.mxu0 %v1196
        %v1369 = vpop.f32.mrf.mxu0
        %v1370 = vadd.f32 %v1122, %v1369
        %v1371 = vpop.f32.mrf.mxu0
        %v1372 = vadd.f32 %v1126, %v1371
        %v1373 = vpop.f32.mrf.mxu0
        %v1374 = vadd.f32 %v1122, %v1373
        %v1375 = vpop.f32.mrf.mxu0
        %v1376 = vadd.f32 %v1126, %v1375
        %1377 = vmatprep.mubr.bf16.mxu0 0
        %1378 = vmatmul.mubr.bf16.gmra.mxu0 %v1197
        %v1379 = vpop.f32.mrf.mxu0
        %v1380 = vadd.f32 %v1122, %v1379
        %v1381 = vpop.f32.mrf.mxu0
        %v1382 = vadd.f32 %v1126, %v1381
        %v1383 = vpop.f32.mrf.mxu0
        %v1384 = vadd.f32 %v1122, %v1383
        %v1385 = vpop.f32.mrf.mxu0
        %v1386 = vadd.f32 %v1126, %v1385
        %1387 = vmatprep.mubr.bf16.mxu0 0
        %1388 = vmatmul.mubr.bf16.gmra.mxu0 %v1198
        %v1389 = vpop.f32.mrf.mxu0
        %v1390 = vadd.f32 %v1122, %v1389
        %v1391 = vpop.f32.mrf.mxu0
        %v1392 = vadd.f32 %v1126, %v1391
        %v1393 = vpop.f32.mrf.mxu0
        %v1394 = vadd.f32 %v1122, %v1393
        %v1395 = vpop.f32.mrf.mxu0
        %v1396 = vadd.f32 %v1126, %v1395
        %1397 = vmatprep.mubr.bf16.mxu0 0
        %1398 = vmatmul.mubr.bf16.gmra.mxu0 %v1199
        %v1399 = vpop.f32.mrf.mxu0
        %v1400 = vadd.f32 %v1122, %v1399
        %v1401 = vpop.f32.mrf.mxu0
        %v1402 = vadd.f32 %v1126, %v1401
        %v1403 = vpop.f32.mrf.mxu0
        %v1404 = vadd.f32 %v1122, %v1403
        %v1405 = vpop.f32.mrf.mxu0
        %v1406 = vadd.f32 %v1126, %v1405
        %1407 = vmatprep.mubr.bf16.mxu0 0
        %1408 = vmatmul.mubr.bf16.gmra.mxu0 %v1200
        %v1409 = vpop.f32.mrf.mxu0
        %v1410 = vadd.f32 %v1122, %v1409
        %v1411 = vpop.f32.mrf.mxu0
        %v1412 = vadd.f32 %v1126, %v1411
        %v1413 = vpop.f32.mrf.mxu0
        %v1414 = vadd.f32 %v1122, %v1413
        %v1415 = vpop.f32.mrf.mxu0
        %v1416 = vadd.f32 %v1126, %v1415
        %1417 = vmatprep.mubr.bf16.mxu0 0
        %1418 = vmatmul.mubr.bf16.gmra.mxu0 %v1201
        %v1419 = vpop.f32.mrf.mxu0
        %v1420 = vadd.f32 %v1122, %v1419
        %v1421 = vpop.f32.mrf.mxu0
        %v1422 = vadd.f32 %v1126, %v1421
        %v1423 = vpop.f32.mrf.mxu0
        %v1424 = vadd.f32 %v1122, %v1423
        %v1425 = vpop.f32.mrf.mxu0
        %v1426 = vadd.f32 %v1126, %v1425
        %1427 = vmatprep.mubr.bf16.mxu0 0
        %1428 = vmatmul.mubr.bf16.gmra.mxu0 %v1202
        %v1429 = vpop.f32.mrf.mxu0
        %v1430 = vadd.f32 %v1122, %v1429
        %v1431 = vpop.f32.mrf.mxu0
        %v1432 = vadd.f32 %v1126, %v1431
        %v1433 = vpop.f32.mrf.mxu0
        %v1434 = vadd.f32 %v1122, %v1433
        %v1435 = vpop.f32.mrf.mxu0
        %v1436 = vadd.f32 %v1126, %v1435
        %1437 = vmatprep.mubr.bf16.mxu0 0
        %1438 = vmatmul.mubr.bf16.gmra.mxu0 %v1203
        %v1439 = vpop.f32.mrf.mxu0
        %v1440 = vadd.f32 %v1122, %v1439
        %v1441 = vpop.f32.mrf.mxu0
        %v1442 = vadd.f32 %v1126, %v1441
        %v1443 = vpop.f32.mrf.mxu0
        %v1444 = vadd.f32 %v1122, %v1443
        %v1445 = vpop.f32.mrf.mxu0
        %v1446 = vadd.f32 %v1126, %v1445
        %1447 = vmatprep.mubr.bf16.mxu0 0
        %1448 = vmatmul.mubr.bf16.gmra.mxu0 %v1204
        %v1449 = vpop.f32.mrf.mxu0
        %v1450 = vadd.f32 %v1122, %v1449
        %v1451 = vpop.f32.mrf.mxu0
        %v1452 = vadd.f32 %v1126, %v1451
        %v1453 = vpop.f32.mrf.mxu0
        %v1454 = vadd.f32 %v1122, %v1453
        %v1455 = vpop.f32.mrf.mxu0
        %v1456 = vadd.f32 %v1126, %v1455
        %1457 = vmatprep.mubr.bf16.mxu0 0
        %1458 = vmatmul.mubr.bf16.gmra.mxu0 %v1205
        %v1459 = vpop.f32.mrf.mxu0
        %v1460 = vadd.f32 %v1122, %v1459
        %v1461 = vpop.f32.mrf.mxu0
        %v1462 = vadd.f32 %v1126, %v1461
        %v1463 = vpop.f32.mrf.mxu0
        %v1464 = vadd.f32 %v1122, %v1463
        %v1465 = vpop.f32.mrf.mxu0
        %v1466 = vadd.f32 %v1126, %v1465
        %1467 = vmatprep.mubr.bf16.mxu0 0
        %1468 = vmatmul.mubr.bf16.gmra.mxu0 %v1206
        %v1469 = vpop.f32.mrf.mxu0
        %v1470 = vadd.f32 %v1122, %v1469
        %v1471 = vpop.f32.mrf.mxu0
        %v1472 = vadd.f32 %v1126, %v1471
        %v1473 = vpop.f32.mrf.mxu0
        %v1474 = vadd.f32 %v1122, %v1473
        %v1475 = vpop.f32.mrf.mxu0
        %v1476 = vadd.f32 %v1126, %v1475
        %1477 = vmatprep.mubr.bf16.mxu0 0
        %1478 = vmatmul.mubr.bf16.gmra.mxu0 %v1207
        %v1479 = vpop.f32.mrf.mxu0
        %v1480 = vadd.f32 %v1122, %v1479
        %v1481 = vpop.f32.mrf.mxu0
        %v1482 = vadd.f32 %v1126, %v1481
        %v1483 = vpop.f32.mrf.mxu0
        %v1484 = vadd.f32 %v1122, %v1483
        %v1485 = vpop.f32.mrf.mxu0
        %v1486 = vadd.f32 %v1126, %v1485
        %1487 = vmatprep.mubr.bf16.mxu0 0
        %1488 = vmatmul.mubr.bf16.gmra.mxu0 %v1208
        %v1489 = vpop.f32.mrf.mxu0
        %v1490 = vadd.f32 %v1122, %v1489
        %v1491 = vpop.f32.mrf.mxu0
        %v1492 = vadd.f32 %v1126, %v1491
        %v1493 = vpop.f32.mrf.mxu0
        %v1494 = vadd.f32 %v1122, %v1493
        %v1495 = vpop.f32.mrf.mxu0
        %v1496 = vadd.f32 %v1126, %v1495
        %1497 = vdwg.mxu0
        %v1498 = vmul.f32 %v1340, 0.5
        %v1499 = vmul.f32 %v1342, 0.5
        %v1500 = vmul.f32 %v1344, 0.5
        %v1501 = vmul.f32 %v1346, 0.5
        %v1502 = vmul.f32 %v1350, 0.5
        %v1503 = vmul.f32 %v1352, 0.5
        %v1504 = vmul.f32 %v1354, 0.5
        %v1505 = vmul.f32 %v1356, 0.5
        %v1506 = vmul.f32 %v1360, 0.5
        %v1507 = vmul.f32 %v1362, 0.5
        %v1508 = vmul.f32 %v1364, 0.5
        %v1509 = vmul.f32 %v1366, 0.5
        %v1510 = vmul.f32 %v1370, 0.5
        %v1511 = vmul.f32 %v1372, 0.5
        %v1512 = vmul.f32 %v1374, 0.5
        %v1513 = vmul.f32 %v1376, 0.5
        %v1514 = vmul.f32 %v1380, 0.5
        %v1515 = vmul.f32 %v1382, 0.5
        %v1516 = vmul.f32 %v1384, 0.5
        %v1517 = vmul.f32 %v1386, 0.5
        %v1518 = vmul.f32 %v1390, 0.5
        %v1519 = vmul.f32 %v1392, 0.5
        %v1520 = vmul.f32 %v1394, 0.5
        %v1521 = vmul.f32 %v1396, 0.5
        %v1522 = vmul.f32 %v1400, 0.5
        %v1523 = vmul.f32 %v1402, 0.5
        %v1524 = vmul.f32 %v1404, 0.5
        %v1525 = vmul.f32 %v1406, 0.5
        %v1526 = vmul.f32 %v1410, 0.5
        %v1527 = vmul.f32 %v1412, 0.5
        %v1528 = vmul.f32 %v1414, 0.5
        %v1529 = vmul.f32 %v1416, 0.5
        %v1530 = vmul.f32 %v1420, 0.5
        %v1531 = vmul.f32 %v1422, 0.5
        %v1532 = vmul.f32 %v1424, 0.5
        %v1533 = vmul.f32 %v1426, 0.5
        %v1534 = vmul.f32 %v1430, 0.5
        %v1535 = vmul.f32 %v1432, 0.5
        %v1536 = vmul.f32 %v1434, 0.5
        %v1537 = vmul.f32 %v1436, 0.5
        %v1538 = vmul.f32 %v1440, 0.5
        %v1539 = vmul.f32 %v1442, 0.5
        %v1540 = vmul.f32 %v1444, 0.5
        %v1541 = vmul.f32 %v1446, 0.5
        %v1542 = vmul.f32 %v1450, 0.5
        %v1543 = vmul.f32 %v1452, 0.5
        %v1544 = vmul.f32 %v1454, 0.5
        %v1545 = vmul.f32 %v1456, 0.5
        %v1546 = vmul.f32 %v1460, 0.5
        %v1547 = vmul.f32 %v1462, 0.5
        %v1548 = vmul.f32 %v1464, 0.5
        %v1549 = vmul.f32 %v1466, 0.5
        %v1550 = vmul.f32 %v1470, 0.5
        %v1551 = vmul.f32 %v1472, 0.5
        %v1552 = vmul.f32 %v1474, 0.5
        %v1553 = vmul.f32 %v1476, 0.5
        %v1554 = vmul.f32 %v1480, 0.5
        %v1555 = vmul.f32 %v1482, 0.5
        %v1556 = vmul.f32 %v1484, 0.5
        %v1557 = vmul.f32 %v1486, 0.5
        %v1558 = vmul.f32 %v1490, 0.5
        %v1559 = vmul.f32 %v1492, 0.5
        %v1560 = vmul.f32 %v1494, 0.5
        %v1561 = vmul.f32 %v1496, 0.5
        %v1562 = vmul.f32 %v1340, 0.70710677
        %v1563 = vmul.f32 %v1342, 0.70710677
        %v1564 = vmul.f32 %v1344, 0.70710677
        %v1565 = vmul.f32 %v1346, 0.70710677
        %v1566 = vmul.f32 %v1350, 0.70710677
        %v1567 = vmul.f32 %v1352, 0.70710677
        %v1568 = vmul.f32 %v1354, 0.70710677
        %v1569 = vmul.f32 %v1356, 0.70710677
        %v1570 = vmul.f32 %v1360, 0.70710677
        %v1571 = vmul.f32 %v1362, 0.70710677
        %v1572 = vmul.f32 %v1364, 0.70710677
        %v1573 = vmul.f32 %v1366, 0.70710677
        %v1574 = vmul.f32 %v1370, 0.70710677
        %v1575 = vmul.f32 %v1372, 0.70710677
        %v1576 = vmul.f32 %v1374, 0.70710677
        %v1577 = vmul.f32 %v1376, 0.70710677
        %v1578 = vmul.f32 %v1380, 0.70710677
        %v1579 = vmul.f32 %v1382, 0.70710677
        %v1580 = vmul.f32 %v1384, 0.70710677
        %v1581 = vmul.f32 %v1386, 0.70710677
        %v1582 = vmul.f32 %v1390, 0.70710677
        %v1583 = vmul.f32 %v1392, 0.70710677
        %v1584 = vmul.f32 %v1394, 0.70710677
        %v1585 = vmul.f32 %v1396, 0.70710677
        %v1586 = vmul.f32 %v1400, 0.70710677
        %v1587 = vmul.f32 %v1402, 0.70710677
        %v1588 = vmul.f32 %v1404, 0.70710677
        %v1589 = vmul.f32 %v1406, 0.70710677
        %v1590 = vmul.f32 %v1410, 0.70710677
        %v1591 = vmul.f32 %v1412, 0.70710677
        %v1592 = vmul.f32 %v1414, 0.70710677
        %v1593 = vmul.f32 %v1416, 0.70710677
        %v1594 = vmul.f32 %v1420, 0.70710677
        %v1595 = vmul.f32 %v1422, 0.70710677
        %v1596 = vmul.f32 %v1424, 0.70710677
        %v1597 = vmul.f32 %v1426, 0.70710677
        %v1598 = vmul.f32 %v1430, 0.70710677
        %v1599 = vmul.f32 %v1432, 0.70710677
        %v1600 = vmul.f32 %v1434, 0.70710677
        %v1601 = vmul.f32 %v1436, 0.70710677
        %v1602 = vmul.f32 %v1440, 0.70710677
        %v1603 = vmul.f32 %v1442, 0.70710677
        %v1604 = vmul.f32 %v1444, 0.70710677
        %v1605 = vmul.f32 %v1446, 0.70710677
        %v1606 = vmul.f32 %v1450, 0.70710677
        %v1607 = vmul.f32 %v1452, 0.70710677
        %v1608 = vmul.f32 %v1454, 0.70710677
        %v1609 = vmul.f32 %v1456, 0.70710677
        %v1610 = vmul.f32 %v1460, 0.70710677
        %v1611 = vmul.f32 %v1462, 0.70710677
        %v1612 = vmul.f32 %v1464, 0.70710677
        %v1613 = vmul.f32 %v1466, 0.70710677
        %v1614 = vmul.f32 %v1470, 0.70710677
        %v1615 = vmul.f32 %v1472, 0.70710677
        %v1616 = vmul.f32 %v1474, 0.70710677
        %v1617 = vmul.f32 %v1476, 0.70710677
        %v1618 = vmul.f32 %v1480, 0.70710677
        %v1619 = vmul.f32 %v1482, 0.70710677
        %v1620 = vmul.f32 %v1484, 0.70710677
        %v1621 = vmul.f32 %v1486, 0.70710677
        %v1622 = vmul.f32 %v1490, 0.70710677
        %v1623 = vmul.f32 %v1492, 0.70710677
        %v1624 = vmul.f32 %v1494, 0.70710677
        %v1625 = vmul.f32 %v1496, 0.70710677
        %v1626 = verf.f32.pop %v1562
        %v1627 = verf.f32.pop %v1563
        %v1628 = verf.f32.pop %v1564
        %v1629 = verf.f32.pop %v1565
        %v1630 = verf.f32.pop %v1566
        %v1631 = verf.f32.pop %v1567
        %v1632 = verf.f32.pop %v1568
        %v1633 = verf.f32.pop %v1569
        %v1634 = verf.f32.pop %v1570
        %v1635 = verf.f32.pop %v1571
        %v1636 = verf.f32.pop %v1572
        %v1637 = verf.f32.pop %v1573
        %v1638 = verf.f32.pop %v1574
        %v1639 = verf.f32.pop %v1575
        %v1640 = verf.f32.pop %v1576
        %v1641 = verf.f32.pop %v1577
        %v1642 = verf.f32.pop %v1578
        %v1643 = verf.f32.pop %v1579
        %v1644 = verf.f32.pop %v1580
        %v1645 = verf.f32.pop %v1581
        %v1646 = verf.f32.pop %v1582
        %v1647 = verf.f32.pop %v1583
        %v1648 = verf.f32.pop %v1584
        %v1649 = verf.f32.pop %v1585
        %v1650 = verf.f32.pop %v1586
        %v1651 = verf.f32.pop %v1587
        %v1652 = verf.f32.pop %v1588
        %v1653 = verf.f32.pop %v1589
        %v1654 = verf.f32.pop %v1590
        %v1655 = verf.f32.pop %v1591
        %v1656 = verf.f32.pop %v1592
        %v1657 = verf.f32.pop %v1593
        %v1658 = verf.f32.pop %v1594
        %v1659 = verf.f32.pop %v1595
        %v1660 = verf.f32.pop %v1596
        %v1661 = verf.f32.pop %v1597
        %v1662 = verf.f32.pop %v1598
        %v1663 = verf.f32.pop %v1599
        %v1664 = verf.f32.pop %v1600
        %v1665 = verf.f32.pop %v1601
        %v1666 = verf.f32.pop %v1602
        %v1667 = verf.f32.pop %v1603
        %v1668 = verf.f32.pop %v1604
        %v1669 = verf.f32.pop %v1605
        %v1670 = verf.f32.pop %v1606
        %v1671 = verf.f32.pop %v1607
        %v1672 = verf.f32.pop %v1608
        %v1673 = verf.f32.pop %v1609
        %v1674 = verf.f32.pop %v1610
        %v1675 = verf.f32.pop %v1611
        %v1676 = verf.f32.pop %v1612
        %v1677 = verf.f32.pop %v1613
        %v1678 = verf.f32.pop %v1614
        %v1679 = verf.f32.pop %v1615
        %v1680 = verf.f32.pop %v1616
        %v1681 = verf.f32.pop %v1617
        %v1682 = verf.f32.pop %v1618
        %v1683 = verf.f32.pop %v1619
        %v1684 = verf.f32.pop %v1620
        %v1685 = verf.f32.pop %v1621
        %v1686 = verf.f32.pop %v1622
        %v1687 = verf.f32.pop %v1623
        %v1688 = verf.f32.pop %v1624
        %v1689 = verf.f32.pop %v1625
        %v1690 = vadd.f32 %v1626, 1.0
        %v1691 = vadd.f32 %v1627, 1.0
        %v1692 = vadd.f32 %v1628, 1.0
        %v1693 = vadd.f32 %v1629, 1.0
        %v1694 = vadd.f32 %v1630, 1.0
        %v1695 = vadd.f32 %v1631, 1.0
        %v1696 = vadd.f32 %v1632, 1.0
        %v1697 = vadd.f32 %v1633, 1.0
        %v1698 = vadd.f32 %v1634, 1.0
        %v1699 = vadd.f32 %v1635, 1.0
        %v1700 = vadd.f32 %v1636, 1.0
        %v1701 = vadd.f32 %v1637, 1.0
        %v1702 = vadd.f32 %v1638, 1.0
        %v1703 = vadd.f32 %v1639, 1.0
        %v1704 = vadd.f32 %v1640, 1.0
        %v1705 = vadd.f32 %v1641, 1.0
        %v1706 = vadd.f32 %v1642, 1.0
        %v1707 = vadd.f32 %v1643, 1.0
        %v1708 = vadd.f32 %v1644, 1.0
        %v1709 = vadd.f32 %v1645, 1.0
        %v1710 = vadd.f32 %v1646, 1.0
        %v1711 = vadd.f32 %v1647, 1.0
        %v1712 = vadd.f32 %v1648, 1.0
        %v1713 = vadd.f32 %v1649, 1.0
        %v1714 = vadd.f32 %v1650, 1.0
        %v1715 = vadd.f32 %v1651, 1.0
        %v1716 = vadd.f32 %v1652, 1.0
        %v1717 = vadd.f32 %v1653, 1.0
        %v1718 = vadd.f32 %v1654, 1.0
        %v1719 = vadd.f32 %v1655, 1.0
        %v1720 = vadd.f32 %v1656, 1.0
        %v1721 = vadd.f32 %v1657, 1.0
        %v1722 = vadd.f32 %v1658, 1.0
        %v1723 = vadd.f32 %v1659, 1.0
        %v1724 = vadd.f32 %v1660, 1.0
        %v1725 = vadd.f32 %v1661, 1.0
        %v1726 = vadd.f32 %v1662, 1.0
        %v1727 = vadd.f32 %v1663, 1.0
        %v1728 = vadd.f32 %v1664, 1.0
        %v1729 = vadd.f32 %v1665, 1.0
        %v1730 = vadd.f32 %v1666, 1.0
        %v1731 = vadd.f32 %v1667, 1.0
        %v1732 = vadd.f32 %v1668, 1.0
        %v1733 = vadd.f32 %v1669, 1.0
        %v1734 = vadd.f32 %v1670, 1.0
        %v1735 = vadd.f32 %v1671, 1.0
        %v1736 = vadd.f32 %v1672, 1.0
        %v1737 = vadd.f32 %v1673, 1.0
        %v1738 = vadd.f32 %v1674, 1.0
        %v1739 = vadd.f32 %v1675, 1.0
        %v1740 = vadd.f32 %v1676, 1.0
        %v1741 = vadd.f32 %v1677, 1.0
        %v1742 = vadd.f32 %v1678, 1.0
        %v1743 = vadd.f32 %v1679, 1.0
        %v1744 = vadd.f32 %v1680, 1.0
        %v1745 = vadd.f32 %v1681, 1.0
        %v1746 = vadd.f32 %v1682, 1.0
        %v1747 = vadd.f32 %v1683, 1.0
        %v1748 = vadd.f32 %v1684, 1.0
        %v1749 = vadd.f32 %v1685, 1.0
        %v1750 = vadd.f32 %v1686, 1.0
        %v1751 = vadd.f32 %v1687, 1.0
        %v1752 = vadd.f32 %v1688, 1.0
        %v1753 = vadd.f32 %v1689, 1.0
        %v1754 = vmul.f32 %v1498, %v1690
        %v1755 = vmul.f32 %v1499, %v1691
        %v1756 = vmul.f32 %v1500, %v1692
        %v1757 = vmul.f32 %v1501, %v1693
        %v1758 = vmul.f32 %v1502, %v1694
        %v1759 = vmul.f32 %v1503, %v1695
        %v1760 = vmul.f32 %v1504, %v1696
        %v1761 = vmul.f32 %v1505, %v1697
        %v1762 = vmul.f32 %v1506, %v1698
        %v1763 = vmul.f32 %v1507, %v1699
        %v1764 = vmul.f32 %v1508, %v1700
        %v1765 = vmul.f32 %v1509, %v1701
        %v1766 = vmul.f32 %v1510, %v1702
        %v1767 = vmul.f32 %v1511, %v1703
        %v1768 = vmul.f32 %v1512, %v1704
        %v1769 = vmul.f32 %v1513, %v1705
        %v1770 = vmul.f32 %v1514, %v1706
        %v1771 = vmul.f32 %v1515, %v1707
        %v1772 = vmul.f32 %v1516, %v1708
        %v1773 = vmul.f32 %v1517, %v1709
        %v1774 = vmul.f32 %v1518, %v1710
        %v1775 = vmul.f32 %v1519, %v1711
        %v1776 = vmul.f32 %v1520, %v1712
        %v1777 = vmul.f32 %v1521, %v1713
        %v1778 = vmul.f32 %v1522, %v1714
        %v1779 = vmul.f32 %v1523, %v1715
        %v1780 = vmul.f32 %v1524, %v1716
        %v1781 = vmul.f32 %v1525, %v1717
        %v1782 = vmul.f32 %v1526, %v1718
        %v1783 = vmul.f32 %v1527, %v1719
        %v1784 = vmul.f32 %v1528, %v1720
        %v1785 = vmul.f32 %v1529, %v1721
        %v1786 = vmul.f32 %v1530, %v1722
        %v1787 = vmul.f32 %v1531, %v1723
        %v1788 = vmul.f32 %v1532, %v1724
        %v1789 = vmul.f32 %v1533, %v1725
        %v1790 = vmul.f32 %v1534, %v1726
        %v1791 = vmul.f32 %v1535, %v1727
        %v1792 = vmul.f32 %v1536, %v1728
        %v1793 = vmul.f32 %v1537, %v1729
        %v1794 = vmul.f32 %v1538, %v1730
        %v1795 = vmul.f32 %v1539, %v1731
        %v1796 = vmul.f32 %v1540, %v1732
        %v1797 = vmul.f32 %v1541, %v1733
        %v1798 = vmul.f32 %v1542, %v1734
        %v1799 = vmul.f32 %v1543, %v1735
        %v1800 = vmul.f32 %v1544, %v1736
        %v1801 = vmul.f32 %v1545, %v1737
        %v1802 = vmul.f32 %v1546, %v1738
        %v1803 = vmul.f32 %v1547, %v1739
        %v1804 = vmul.f32 %v1548, %v1740
        %v1805 = vmul.f32 %v1549, %v1741
        %v1806 = vmul.f32 %v1550, %v1742
        %v1807 = vmul.f32 %v1551, %v1743
        %v1808 = vmul.f32 %v1552, %v1744
        %v1809 = vmul.f32 %v1553, %v1745
        %v1810 = vmul.f32 %v1554, %v1746
        %v1811 = vmul.f32 %v1555, %v1747
        %v1812 = vmul.f32 %v1556, %v1748
        %v1813 = vmul.f32 %v1557, %v1749
        %v1814 = vmul.f32 %v1558, %v1750
        %v1815 = vmul.f32 %v1559, %v1751
        %v1816 = vmul.f32 %v1560, %v1752
        %v1817 = vmul.f32 %v1561, %v1753
        %v1818 = vld [vmem:[#allocation3] sm:$0xff]
        %v1819 = vld [vmem:[#allocation3 + $0x8] sm:$0xff]
        %v1820 = vld [vmem:[#allocation3 + $0x10] sm:$0xff]
        %v1821 = vld [vmem:[#allocation3 + $0x18] sm:$0xff]
        %v1822 = vld [vmem:[#allocation3 + $0x20] sm:$0xff]
        %v1823 = vld [vmem:[#allocation3 + $0x28] sm:$0xff]
        %v1824 = vld [vmem:[#allocation3 + $0x30] sm:$0xff]
        %v1825 = vld [vmem:[#allocation3 + $0x38] sm:$0xff]
        %v1826 = vld [vmem:[#allocation3 + $0x40] sm:$0xff]
        %v1827 = vld [vmem:[#allocation3 + $0x48] sm:$0xff]
        %v1828 = vld [vmem:[#allocation3 + $0x50] sm:$0xff]
        %v1829 = vld [vmem:[#allocation3 + $0x58] sm:$0xff]
        %v1830 = vld [vmem:[#allocation3 + $0x60] sm:$0xff]
        %v1831 = vld [vmem:[#allocation3 + $0x68] sm:$0xff]
        %v1832 = vld [vmem:[#allocation3 + $0x70] sm:$0xff]
        %v1833 = vld [vmem:[#allocation3 + $0x78] sm:$0xff]
        %v1834 = vld [vmem:[#allocation3 + $0x80] sm:$0xff]
        %v1835 = vld [vmem:[#allocation3 + $0x88] sm:$0xff]
        %v1836 = vld [vmem:[#allocation3 + $0x90] sm:$0xff]
        %v1837 = vld [vmem:[#allocation3 + $0x98] sm:$0xff]
        %v1838 = vld [vmem:[#allocation3 + $0xa0] sm:$0xff]
        %v1839 = vld [vmem:[#allocation3 + $0xa8] sm:$0xff]
        %v1840 = vld [vmem:[#allocation3 + $0xb0] sm:$0xff]
        %v1841 = vld [vmem:[#allocation3 + $0xb8] sm:$0xff]
        %v1842 = vld [vmem:[#allocation3 + $0xc0] sm:$0xff]
        %v1843 = vld [vmem:[#allocation3 + $0xc8] sm:$0xff]
        %v1844 = vld [vmem:[#allocation3 + $0xd0] sm:$0xff]
        %v1845 = vld [vmem:[#allocation3 + $0xd8] sm:$0xff]
        %v1846 = vld [vmem:[#allocation3 + $0xe0] sm:$0xff]
        %v1847 = vld [vmem:[#allocation3 + $0xe8] sm:$0xff]
        %v1848 = vld [vmem:[#allocation3 + $0xf0] sm:$0xff]
        %v1849 = vld [vmem:[#allocation3 + $0xf8] sm:$0xff]
        %v1850 = vpack.c.bf16 %v1756, %v1754
        %v1851 = vpack.c.bf16 %v1757, %v1755
        %v1852 = vpack.c.bf16 %v1760, %v1758
        %v1853 = vpack.c.bf16 %v1761, %v1759
        %v1854 = vpack.c.bf16 %v1764, %v1762
        %v1855 = vpack.c.bf16 %v1765, %v1763
        %v1856 = vpack.c.bf16 %v1768, %v1766
        %v1857 = vpack.c.bf16 %v1769, %v1767
        %v1858 = vpack.c.bf16 %v1772, %v1770
        %v1859 = vpack.c.bf16 %v1773, %v1771
        %v1860 = vpack.c.bf16 %v1776, %v1774
        %v1861 = vpack.c.bf16 %v1777, %v1775
        %v1862 = vpack.c.bf16 %v1780, %v1778
        %v1863 = vpack.c.bf16 %v1781, %v1779
        %v1864 = vpack.c.bf16 %v1784, %v1782
        %v1865 = vpack.c.bf16 %v1785, %v1783
        %v1866 = vpack.c.bf16 %v1788, %v1786
        %v1867 = vpack.c.bf16 %v1789, %v1787
        %v1868 = vpack.c.bf16 %v1792, %v1790
        %v1869 = vpack.c.bf16 %v1793, %v1791
        %v1870 = vpack.c.bf16 %v1796, %v1794
        %v1871 = vpack.c.bf16 %v1797, %v1795
        %v1872 = vpack.c.bf16 %v1800, %v1798
        %v1873 = vpack.c.bf16 %v1801, %v1799
        %v1874 = vpack.c.bf16 %v1804, %v1802
        %v1875 = vpack.c.bf16 %v1805, %v1803
        %v1876 = vpack.c.bf16 %v1808, %v1806
        %v1877 = vpack.c.bf16 %v1809, %v1807
        %v1878 = vpack.c.bf16 %v1812, %v1810
        %v1879 = vpack.c.bf16 %v1813, %v1811
        %v1880 = vpack.c.bf16 %v1816, %v1814
        %v1881 = vpack.c.bf16 %v1817, %v1815
        %v1882 = vld [vmem:[%s355] sm:$0xf]
        %v1883 = vld [vmem:[%s355 + $0x4] sm:$0xf]
        %v1884 = vld [vmem:[%s355 + $0x8] sm:$0xf]
        %v1885 = vld [vmem:[%s355 + $0xc] sm:$0xf]
        %v1886 = vld [vmem:[%s355 + $0x10] sm:$0xf]
        %v1887 = vld [vmem:[%s355 + $0x14] sm:$0xf]
        %v1888 = vld [vmem:[%s355 + $0x18] sm:$0xf]
        %v1889 = vld [vmem:[%s355 + $0x1c] sm:$0xf]
        %v1890 = vld [vmem:[%s355 + $0x20] sm:$0xf]
        %v1891 = vld [vmem:[%s355 + $0x24] sm:$0xf]
        %v1892 = vld [vmem:[%s355 + $0x28] sm:$0xf]
        %v1893 = vld [vmem:[%s355 + $0x2c] sm:$0xf]
        %v1894 = vld [vmem:[%s355 + $0x30] sm:$0xf]
        %v1895 = vld [vmem:[%s355 + $0x34] sm:$0xf]
        %v1896 = vld [vmem:[%s355 + $0x38] sm:$0xf]
        %v1897 = vld [vmem:[%s355 + $0x3c] sm:$0xf]
        %v1898 = vld [vmem:[%s355 + $0x40] sm:$0xf]
        %v1899 = vld [vmem:[%s355 + $0x44] sm:$0xf]
        %v1900 = vld [vmem:[%s355 + $0x48] sm:$0xf]
        %v1901 = vld [vmem:[%s355 + $0x4c] sm:$0xf]
        %v1902 = vld [vmem:[%s355 + $0x50] sm:$0xf]
        %v1903 = vld [vmem:[%s355 + $0x54] sm:$0xf]
        %v1904 = vld [vmem:[%s355 + $0x58] sm:$0xf]
        %v1905 = vld [vmem:[%s355 + $0x5c] sm:$0xf]
        %v1906 = vld [vmem:[%s355 + $0x60] sm:$0xf]
        %v1907 = vld [vmem:[%s355 + $0x64] sm:$0xf]
        %v1908 = vld [vmem:[%s355 + $0x68] sm:$0xf]
        %v1909 = vld [vmem:[%s355 + $0x6c] sm:$0xf]
        %v1910 = vld [vmem:[%s355 + $0x70] sm:$0xf]
        %v1911 = vld [vmem:[%s355 + $0x74] sm:$0xf]
        %v1912 = vld [vmem:[%s355 + $0x78] sm:$0xf]
        %v1913 = vld [vmem:[%s355 + $0x7c] sm:$0xf]
        %v1946 = vunpack.c.l.b16 %v1882
        %v1947 = vunpack.c.l.b16 %v1883
        %v1948 = vunpack.c.l.b16 %v1884
        %v1949 = vunpack.c.l.b16 %v1885
        %v1950 = vunpack.c.l.b16 %v1886
        %v1951 = vunpack.c.l.b16 %v1887
        %v1952 = vunpack.c.l.b16 %v1888
        %v1953 = vunpack.c.l.b16 %v1889
        %v1954 = vunpack.c.l.b16 %v1890
        %v1955 = vunpack.c.l.b16 %v1891
        %v1956 = vunpack.c.l.b16 %v1892
        %v1957 = vunpack.c.l.b16 %v1893
        %v1958 = vunpack.c.l.b16 %v1894
        %v1959 = vunpack.c.l.b16 %v1895
        %v1960 = vunpack.c.l.b16 %v1896
        %v1961 = vunpack.c.l.b16 %v1897
        %v1962 = vunpack.c.l.b16 %v1898
        %v1963 = vunpack.c.l.b16 %v1899
        %v1964 = vunpack.c.l.b16 %v1900
        %v1965 = vunpack.c.l.b16 %v1901
        %v1966 = vunpack.c.l.b16 %v1902
        %v1967 = vunpack.c.l.b16 %v1903
        %v1968 = vunpack.c.l.b16 %v1904
        %v1969 = vunpack.c.l.b16 %v1905
        %v1970 = vunpack.c.l.b16 %v1906
        %v1971 = vunpack.c.l.b16 %v1907
        %v1972 = vunpack.c.l.b16 %v1908
        %v1973 = vunpack.c.l.b16 %v1909
        %v1974 = vunpack.c.l.b16 %v1910
        %v1975 = vunpack.c.l.b16 %v1911
        %v1976 = vunpack.c.l.b16 %v1912
        %v1977 = vunpack.c.l.b16 %v1913
        %v1978 = vpack.c.b16 %v1947, %v1946
        %v1979 = vpack.c.b16 %v1949, %v1948
        %v1980 = vpack.c.b16 %v1951, %v1950
        %v1981 = vpack.c.b16 %v1953, %v1952
        %v1982 = vpack.c.b16 %v1955, %v1954
        %v1983 = vpack.c.b16 %v1957, %v1956
        %v1984 = vpack.c.b16 %v1959, %v1958
        %v1985 = vpack.c.b16 %v1961, %v1960
        %v1986 = vpack.c.b16 %v1963, %v1962
        %v1987 = vpack.c.b16 %v1965, %v1964
        %v1988 = vpack.c.b16 %v1967, %v1966
        %v1989 = vpack.c.b16 %v1969, %v1968
        %v1990 = vpack.c.b16 %v1971, %v1970
        %v1991 = vpack.c.b16 %v1973, %v1972
        %v1992 = vpack.c.b16 %v1975, %v1974
        %v1993 = vpack.c.b16 %v1977, %v1976
        %2010 = vmatprep.subr.bf16.mxu0 0
        %2011 = vmatpush1.bf16.msra.mxu0 %v1985
        %2012 = vmatprep.subr.bf16.mxu0 0
        %2013 = vmatpush1.bf16.msra.mxu0 %v1984
        %2014 = vmatprep.subr.bf16.mxu0 0
        %2015 = vmatpush1.bf16.msra.mxu0 %v1983
        %2016 = vmatprep.subr.bf16.mxu0 0
        %2017 = vmatpush1.bf16.msra.mxu0 %v1982
        %2018 = vmatprep.subr.bf16.mxu0 0
        %2019 = vmatpush1.bf16.msra.mxu0 %v1981
        %2020 = vmatprep.subr.bf16.mxu0 0
        %2021 = vmatpush1.bf16.msra.mxu0 %v1980
        %2022 = vmatprep.subr.bf16.mxu0 0
        %2023 = vmatpush1.bf16.msra.mxu0 %v1979
        %2024 = vmatprep.subr.bf16.mxu0 0
        %2025 = vmatpush1.bf16.msra.mxu0 %v1978
        %2026 = vmatprep.subr.bf16.mxu0 0
        %2027 = vmatpush2.bf16.msra.mxu0 %v1993
        %2028 = vmatprep.subr.bf16.mxu0 0
        %2029 = vmatpush2.bf16.msra.mxu0 %v1992
        %2030 = vmatprep.subr.bf16.mxu0 0
        %2031 = vmatpush2.bf16.msra.mxu0 %v1991
        %2032 = vmatprep.subr.bf16.mxu0 0
        %2033 = vmatpush2.bf16.msra.mxu0 %v1990
        %2034 = vmatprep.subr.bf16.mxu0 0
        %2035 = vmatpush2.bf16.msra.mxu0 %v1989
        %2036 = vmatprep.subr.bf16.mxu0 0
        %2037 = vmatpush2.bf16.msra.mxu0 %v1988
        %2038 = vmatprep.subr.bf16.mxu0 0
        %2039 = vmatpush2.bf16.msra.mxu0 %v1987
        %2040 = vmatprep.subr.bf16.mxu0 0
        %2041 = vmatpush2.bf16.msra.mxu0 %v1986
        %2042 = vmatprep.mubr.bf16.mxu0 %v1851
        %2043 = vmatmul.mubr.bf16.gmra.mxu0 %v1850
        %v2044 = vpop.f32.mrf.mxu0
        %v2045 = vadd.f32 0.0, %v2044
        %v2046 = vpop.f32.mrf.mxu0
        %v2047 = vpop.f32.mrf.mxu0
        %v2048 = vadd.f32 0.0, %v2047
        %v2049 = vpop.f32.mrf.mxu0
        %2050 = vmatprep.mubr.bf16.mxu0 %v1853
        %2051 = vmatmul.mubr.bf16.gmra.mxu0 %v1852
        %v2052 = vpop.f32.mrf.mxu0
        %v2053 = vadd.f32 0.0, %v2052
        %v2054 = vpop.f32.mrf.mxu0
        %v2055 = vpop.f32.mrf.mxu0
        %v2056 = vadd.f32 0.0, %v2055
        %v2057 = vpop.f32.mrf.mxu0
        %2058 = vmatprep.mubr.bf16.mxu0 %v1855
        %2059 = vmatmul.mubr.bf16.gmra.mxu0 %v1854
        %v2060 = vpop.f32.mrf.mxu0
        %v2061 = vadd.f32 0.0, %v2060
        %v2062 = vpop.f32.mrf.mxu0
        %v2063 = vpop.f32.mrf.mxu0
        %v2064 = vadd.f32 0.0, %v2063
        %v2065 = vpop.f32.mrf.mxu0
        %2066 = vmatprep.mubr.bf16.mxu0 %v1857
        %2067 = vmatmul.mubr.bf16.gmra.mxu0 %v1856
        %v2068 = vpop.f32.mrf.mxu0
        %v2069 = vadd.f32 0.0, %v2068
        %v2070 = vpop.f32.mrf.mxu0
        %v2071 = vpop.f32.mrf.mxu0
        %v2072 = vadd.f32 0.0, %v2071
        %v2073 = vpop.f32.mrf.mxu0
        %2074 = vmatprep.mubr.bf16.mxu0 %v1859
        %2075 = vmatmul.mubr.bf16.gmra.mxu0 %v1858
        %v2076 = vpop.f32.mrf.mxu0
        %v2077 = vadd.f32 0.0, %v2076
        %v2078 = vpop.f32.mrf.mxu0
        %v2079 = vpop.f32.mrf.mxu0
        %v2080 = vadd.f32 0.0, %v2079
        %v2081 = vpop.f32.mrf.mxu0
        %2082 = vmatprep.mubr.bf16.mxu0 %v1861
        %2083 = vmatmul.mubr.bf16.gmra.mxu0 %v1860
        %v2084 = vpop.f32.mrf.mxu0
        %v2085 = vadd.f32 0.0, %v2084
        %v2086 = vpop.f32.mrf.mxu0
        %v2087 = vpop.f32.mrf.mxu0
        %v2088 = vadd.f32 0.0, %v2087
        %v2089 = vpop.f32.mrf.mxu0
        %2090 = vmatprep.mubr.bf16.mxu0 %v1863
        %2091 = vmatmul.mubr.bf16.gmra.mxu0 %v1862
        %v2092 = vpop.f32.mrf.mxu0
        %v2093 = vadd.f32 0.0, %v2092
        %v2094 = vpop.f32.mrf.mxu0
        %v2095 = vpop.f32.mrf.mxu0
        %v2096 = vadd.f32 0.0, %v2095
        %v2097 = vpop.f32.mrf.mxu0
        %2098 = vmatprep.mubr.bf16.mxu0 %v1865
        %2099 = vmatmul.mubr.bf16.gmra.mxu0 %v1864
        %v2100 = vpop.f32.mrf.mxu0
        %v2101 = vadd.f32 0.0, %v2100
        %v2102 = vpop.f32.mrf.mxu0
        %v2103 = vpop.f32.mrf.mxu0
        %v2104 = vadd.f32 0.0, %v2103
        %v2105 = vpop.f32.mrf.mxu0
        %2106 = vmatprep.mubr.bf16.mxu0 %v1867
        %2107 = vmatmul.mubr.bf16.gmra.mxu0 %v1866
        %v2108 = vpop.f32.mrf.mxu0
        %v2109 = vadd.f32 0.0, %v2108
        %v2110 = vpop.f32.mrf.mxu0
        %v2111 = vpop.f32.mrf.mxu0
        %v2112 = vadd.f32 0.0, %v2111
        %v2113 = vpop.f32.mrf.mxu0
        %2114 = vmatprep.mubr.bf16.mxu0 %v1869
        %2115 = vmatmul.mubr.bf16.gmra.mxu0 %v1868
        %v2116 = vpop.f32.mrf.mxu0
        %v2117 = vadd.f32 0.0, %v2116
        %v2118 = vpop.f32.mrf.mxu0
        %v2119 = vpop.f32.mrf.mxu0
        %v2120 = vadd.f32 0.0, %v2119
        %v2121 = vpop.f32.mrf.mxu0
        %2122 = vmatprep.mubr.bf16.mxu0 %v1871
        %2123 = vmatmul.mubr.bf16.gmra.mxu0 %v1870
        %v2124 = vpop.f32.mrf.mxu0
        %v2125 = vadd.f32 0.0, %v2124
        %v2126 = vpop.f32.mrf.mxu0
        %v2127 = vpop.f32.mrf.mxu0
        %v2128 = vadd.f32 0.0, %v2127
        %v2129 = vpop.f32.mrf.mxu0
        %2130 = vmatprep.mubr.bf16.mxu0 %v1873
        %2131 = vmatmul.mubr.bf16.gmra.mxu0 %v1872
        %v2132 = vpop.f32.mrf.mxu0
        %v2133 = vadd.f32 0.0, %v2132
        %v2134 = vpop.f32.mrf.mxu0
        %v2135 = vpop.f32.mrf.mxu0
        %v2136 = vadd.f32 0.0, %v2135
        %v2137 = vpop.f32.mrf.mxu0
        %2138 = vmatprep.mubr.bf16.mxu0 %v1875
        %2139 = vmatmul.mubr.bf16.gmra.mxu0 %v1874
        %v2140 = vpop.f32.mrf.mxu0
        %v2141 = vadd.f32 0.0, %v2140
        %v2142 = vpop.f32.mrf.mxu0
        %v2143 = vpop.f32.mrf.mxu0
        %v2144 = vadd.f32 0.0, %v2143
        %v2145 = vpop.f32.mrf.mxu0
        %2146 = vmatprep.mubr.bf16.mxu0 %v1877
        %2147 = vmatmul.mubr.bf16.gmra.mxu0 %v1876
        %v2148 = vpop.f32.mrf.mxu0
        %v2149 = vadd.f32 0.0, %v2148
        %v2150 = vpop.f32.mrf.mxu0
        %v2151 = vpop.f32.mrf.mxu0
        %v2152 = vadd.f32 0.0, %v2151
        %v2153 = vpop.f32.mrf.mxu0
        %2154 = vmatprep.mubr.bf16.mxu0 %v1879
        %2155 = vmatmul.mubr.bf16.gmra.mxu0 %v1878
        %v2156 = vpop.f32.mrf.mxu0
        %v2157 = vadd.f32 0.0, %v2156
        %v2158 = vpop.f32.mrf.mxu0
        %v2159 = vpop.f32.mrf.mxu0
        %v2160 = vadd.f32 0.0, %v2159
        %v2161 = vpop.f32.mrf.mxu0
        %2162 = vmatprep.mubr.bf16.mxu0 %v1881
        %2163 = vmatmul.mubr.bf16.gmra.mxu0 %v1880
        %v2164 = vpop.f32.mrf.mxu0
        %v2165 = vadd.f32 0.0, %v2164
        %v2166 = vpop.f32.mrf.mxu0
        %v2167 = vpop.f32.mrf.mxu0
        %v2168 = vadd.f32 0.0, %v2167
        %v2169 = vpop.f32.mrf.mxu0
        %2170 = vdwg.mxu0
        %v2171 = vadd.f32 %v1818, %v2045
        %v2172 = vadd.f32 %v1819, %v2048
        %v2173 = vadd.f32 %v1820, %v2053
        %v2174 = vadd.f32 %v1821, %v2056
        %v2175 = vadd.f32 %v1822, %v2061
        %v2176 = vadd.f32 %v1823, %v2064
        %v2177 = vadd.f32 %v1824, %v2069
        %v2178 = vadd.f32 %v1825, %v2072
        %v2179 = vadd.f32 %v1826, %v2077
        %v2180 = vadd.f32 %v1827, %v2080
        %v2181 = vadd.f32 %v1828, %v2085
        %v2182 = vadd.f32 %v1829, %v2088
        %v2183 = vadd.f32 %v1830, %v2093
        %v2184 = vadd.f32 %v1831, %v2096
        %v2185 = vadd.f32 %v1832, %v2101
        %v2186 = vadd.f32 %v1833, %v2104
        %v2187 = vadd.f32 %v1834, %v2109
        %v2188 = vadd.f32 %v1835, %v2112
        %v2189 = vadd.f32 %v1836, %v2117
        %v2190 = vadd.f32 %v1837, %v2120
        %v2191 = vadd.f32 %v1838, %v2125
        %v2192 = vadd.f32 %v1839, %v2128
        %v2193 = vadd.f32 %v1840, %v2133
        %v2194 = vadd.f32 %v1841, %v2136
        %v2195 = vadd.f32 %v1842, %v2141
        %v2196 = vadd.f32 %v1843, %v2144
        %v2197 = vadd.f32 %v1844, %v2149
        %v2198 = vadd.f32 %v1845, %v2152
        %v2199 = vadd.f32 %v1846, %v2157
        %v2200 = vadd.f32 %v1847, %v2160
        %v2201 = vadd.f32 %v1848, %v2165
        %v2202 = vadd.f32 %v1849, %v2168
        %2203 = vst [vmem:[#allocation3] sm:$0xff] %v2171
        %2204 = vst [vmem:[#allocation3 + $0x8] sm:$0xff] %v2172
        %2205 = vst [vmem:[#allocation3 + $0x10] sm:$0xff] %v2173
        %2206 = vst [vmem:[#allocation3 + $0x18] sm:$0xff] %v2174
        %2207 = vst [vmem:[#allocation3 + $0x20] sm:$0xff] %v2175
        %2208 = vst [vmem:[#allocation3 + $0x28] sm:$0xff] %v2176
        %2209 = vst [vmem:[#allocation3 + $0x30] sm:$0xff] %v2177
        %2210 = vst [vmem:[#allocation3 + $0x38] sm:$0xff] %v2178
        %2211 = vst [vmem:[#allocation3 + $0x40] sm:$0xff] %v2179
        %2212 = vst [vmem:[#allocation3 + $0x48] sm:$0xff] %v2180
        %2213 = vst [vmem:[#allocation3 + $0x50] sm:$0xff] %v2181
        %2214 = vst [vmem:[#allocation3 + $0x58] sm:$0xff] %v2182
        %2215 = vst [vmem:[#allocation3 + $0x60] sm:$0xff] %v2183
        %2216 = vst [vmem:[#allocation3 + $0x68] sm:$0xff] %v2184
        %2217 = vst [vmem:[#allocation3 + $0x70] sm:$0xff] %v2185
        %2218 = vst [vmem:[#allocation3 + $0x78] sm:$0xff] %v2186
        %2219 = vst [vmem:[#allocation3 + $0x80] sm:$0xff] %v2187
        %2220 = vst [vmem:[#allocation3 + $0x88] sm:$0xff] %v2188
        %2221 = vst [vmem:[#allocation3 + $0x90] sm:$0xff] %v2189
        %2222 = vst [vmem:[#allocation3 + $0x98] sm:$0xff] %v2190
        %2223 = vst [vmem:[#allocation3 + $0xa0] sm:$0xff] %v2191
        %2224 = vst [vmem:[#allocation3 + $0xa8] sm:$0xff] %v2192
        %2225 = vst [vmem:[#allocation3 + $0xb0] sm:$0xff] %v2193
        %2226 = vst [vmem:[#allocation3 + $0xb8] sm:$0xff] %v2194
        %2227 = vst [vmem:[#allocation3 + $0xc0] sm:$0xff] %v2195
        %2228 = vst [vmem:[#allocation3 + $0xc8] sm:$0xff] %v2196
        %2229 = vst [vmem:[#allocation3 + $0xd0] sm:$0xff] %v2197
        %2230 = vst [vmem:[#allocation3 + $0xd8] sm:$0xff] %v2198
        %2231 = vst [vmem:[#allocation3 + $0xe0] sm:$0xff] %v2199
        %2232 = vst [vmem:[#allocation3 + $0xe8] sm:$0xff] %v2200
        %2233 = vst [vmem:[#allocation3 + $0xf0] sm:$0xff] %v2201
        %2234 = vst [vmem:[#allocation3 + $0xf8] sm:$0xff] %v2202
        %p2235 = scmp.eq.s32.totalorder %s32, 1
        // Predicated region
        $region65: #{tpu_custom_call.1} parent=47 // pred_check
          %p2236 = pneg %p2235
        $region66: #{tpu_custom_call.1} parent=47 // pred_check_branch
          %2238 = sbr.rel (%p2236) target = $region68
        $region67: #{tpu_custom_call.1} parent=47 // pred_region
          %v2239 = vld [vmem:[#allocation3] sm:$0xff]
          %v2240 = vld [vmem:[#allocation3 + $0x8] sm:$0xff]
          %v2241 = vld [vmem:[#allocation3 + $0x10] sm:$0xff]
          %v2242 = vld [vmem:[#allocation3 + $0x18] sm:$0xff]
          %v2243 = vld [vmem:[#allocation3 + $0x20] sm:$0xff]
          %v2244 = vld [vmem:[#allocation3 + $0x28] sm:$0xff]
          %v2245 = vld [vmem:[#allocation3 + $0x30] sm:$0xff]
          %v2246 = vld [vmem:[#allocation3 + $0x38] sm:$0xff]
          %v2247 = vld [vmem:[#allocation3 + $0x40] sm:$0xff]
          %v2248 = vld [vmem:[#allocation3 + $0x48] sm:$0xff]
          %v2249 = vld [vmem:[#allocation3 + $0x50] sm:$0xff]
          %v2250 = vld [vmem:[#allocation3 + $0x58] sm:$0xff]
          %v2251 = vld [vmem:[#allocation3 + $0x60] sm:$0xff]
          %v2252 = vld [vmem:[#allocation3 + $0x68] sm:$0xff]
          %v2253 = vld [vmem:[#allocation3 + $0x70] sm:$0xff]
          %v2254 = vld [vmem:[#allocation3 + $0x78] sm:$0xff]
          %v2255 = vld [vmem:[#allocation3 + $0x80] sm:$0xff]
          %v2256 = vld [vmem:[#allocation3 + $0x88] sm:$0xff]
          %v2257 = vld [vmem:[#allocation3 + $0x90] sm:$0xff]
          %v2258 = vld [vmem:[#allocation3 + $0x98] sm:$0xff]
          %v2259 = vld [vmem:[#allocation3 + $0xa0] sm:$0xff]
          %v2260 = vld [vmem:[#allocation3 + $0xa8] sm:$0xff]
          %v2261 = vld [vmem:[#allocation3 + $0xb0] sm:$0xff]
          %v2262 = vld [vmem:[#allocation3 + $0xb8] sm:$0xff]
          %v2263 = vld [vmem:[#allocation3 + $0xc0] sm:$0xff]
          %v2264 = vld [vmem:[#allocation3 + $0xc8] sm:$0xff]
          %v2265 = vld [vmem:[#allocation3 + $0xd0] sm:$0xff]
          %v2266 = vld [vmem:[#allocation3 + $0xd8] sm:$0xff]
          %v2267 = vld [vmem:[#allocation3 + $0xe0] sm:$0xff]
          %v2268 = vld [vmem:[#allocation3 + $0xe8] sm:$0xff]
          %v2269 = vld [vmem:[#allocation3 + $0xf0] sm:$0xff]
          %v2270 = vld [vmem:[#allocation3 + $0xf8] sm:$0xff]
          %v2271 = vld [vmem:[%s6] sm:$0x1]
          %v2273 = vlaneseq
          %v2274 = vshrl.u32 %v2273, 7
          %v2275 = vsub.s32 0, %v2274
          %v2276 = vrot.slane %v2271, %v2275
          %v2278 = vadd.f32 %v2239, %v2276
          %v2279 = vadd.f32 %v2240, %v2276
          %v2280 = vadd.f32 %v2241, %v2276
          %v2281 = vadd.f32 %v2242, %v2276
          %v2282 = vadd.f32 %v2243, %v2276
          %v2283 = vadd.f32 %v2244, %v2276
          %v2284 = vadd.f32 %v2245, %v2276
          %v2285 = vadd.f32 %v2246, %v2276
          %v2286 = vadd.f32 %v2247, %v2276
          %v2287 = vadd.f32 %v2248, %v2276
          %v2288 = vadd.f32 %v2249, %v2276
          %v2289 = vadd.f32 %v2250, %v2276
          %v2290 = vadd.f32 %v2251, %v2276
          %v2291 = vadd.f32 %v2252, %v2276
          %v2292 = vadd.f32 %v2253, %v2276
          %v2293 = vadd.f32 %v2254, %v2276
          %v2294 = vadd.f32 %v2255, %v2276
          %v2295 = vadd.f32 %v2256, %v2276
          %v2296 = vadd.f32 %v2257, %v2276
          %v2297 = vadd.f32 %v2258, %v2276
          %v2298 = vadd.f32 %v2259, %v2276
          %v2299 = vadd.f32 %v2260, %v2276
          %v2300 = vadd.f32 %v2261, %v2276
          %v2301 = vadd.f32 %v2262, %v2276
          %v2302 = vadd.f32 %v2263, %v2276
          %v2303 = vadd.f32 %v2264, %v2276
          %v2304 = vadd.f32 %v2265, %v2276
          %v2305 = vadd.f32 %v2266, %v2276
          %v2306 = vadd.f32 %v2267, %v2276
          %v2307 = vadd.f32 %v2268, %v2276
          %v2308 = vadd.f32 %v2269, %v2276
          %v2309 = vadd.f32 %v2270, %v2276
          %v2310 = vld [vmem:[%s337] sm:$0xff]
          %v2311 = vld [vmem:[%s337 + $0x8] sm:$0xff]
          %v2312 = vld [vmem:[%s337 + $0x10] sm:$0xff]
          %v2313 = vld [vmem:[%s337 + $0x18] sm:$0xff]
          %v2314 = vld [vmem:[%s337 + $0x20] sm:$0xff]
          %v2315 = vld [vmem:[%s337 + $0x28] sm:$0xff]
          %v2316 = vld [vmem:[%s337 + $0x30] sm:$0xff]
          %v2317 = vld [vmem:[%s337 + $0x38] sm:$0xff]
          %v2318 = vld [vmem:[%s337 + $0x40] sm:$0xff]
          %v2319 = vld [vmem:[%s337 + $0x48] sm:$0xff]
          %v2320 = vld [vmem:[%s337 + $0x50] sm:$0xff]
          %v2321 = vld [vmem:[%s337 + $0x58] sm:$0xff]
          %v2322 = vld [vmem:[%s337 + $0x60] sm:$0xff]
          %v2323 = vld [vmem:[%s337 + $0x68] sm:$0xff]
          %v2324 = vld [vmem:[%s337 + $0x70] sm:$0xff]
          %v2325 = vld [vmem:[%s337 + $0x78] sm:$0xff]
          %v2326 = vld [vmem:[%s337 + $0x80] sm:$0xff]
          %v2327 = vld [vmem:[%s337 + $0x88] sm:$0xff]
          %v2328 = vld [vmem:[%s337 + $0x90] sm:$0xff]
          %v2329 = vld [vmem:[%s337 + $0x98] sm:$0xff]
          %v2330 = vld [vmem:[%s337 + $0xa0] sm:$0xff]
          %v2331 = vld [vmem:[%s337 + $0xa8] sm:$0xff]
          %v2332 = vld [vmem:[%s337 + $0xb0] sm:$0xff]
          %v2333 = vld [vmem:[%s337 + $0xb8] sm:$0xff]
          %v2334 = vld [vmem:[%s337 + $0xc0] sm:$0xff]
          %v2335 = vld [vmem:[%s337 + $0xc8] sm:$0xff]
          %v2336 = vld [vmem:[%s337 + $0xd0] sm:$0xff]
          %v2337 = vld [vmem:[%s337 + $0xd8] sm:$0xff]
          %v2338 = vld [vmem:[%s337 + $0xe0] sm:$0xff]
          %v2339 = vld [vmem:[%s337 + $0xe8] sm:$0xff]
          %v2340 = vld [vmem:[%s337 + $0xf0] sm:$0xff]
          %v2341 = vld [vmem:[%s337 + $0xf8] sm:$0xff]
          %v2342 = vadd.f32 %v2310, %v2278
          %v2343 = vadd.f32 %v2311, %v2279
          %v2344 = vadd.f32 %v2312, %v2280
          %v2345 = vadd.f32 %v2313, %v2281
          %v2346 = vadd.f32 %v2314, %v2282
          %v2347 = vadd.f32 %v2315, %v2283
          %v2348 = vadd.f32 %v2316, %v2284
          %v2349 = vadd.f32 %v2317, %v2285
          %v2350 = vadd.f32 %v2318, %v2286
          %v2351 = vadd.f32 %v2319, %v2287
          %v2352 = vadd.f32 %v2320, %v2288
          %v2353 = vadd.f32 %v2321, %v2289
          %v2354 = vadd.f32 %v2322, %v2290
          %v2355 = vadd.f32 %v2323, %v2291
          %v2356 = vadd.f32 %v2324, %v2292
          %v2357 = vadd.f32 %v2325, %v2293
          %v2358 = vadd.f32 %v2326, %v2294
          %v2359 = vadd.f32 %v2327, %v2295
          %v2360 = vadd.f32 %v2328, %v2296
          %v2361 = vadd.f32 %v2329, %v2297
          %v2362 = vadd.f32 %v2330, %v2298
          %v2363 = vadd.f32 %v2331, %v2299
          %v2364 = vadd.f32 %v2332, %v2300
          %v2365 = vadd.f32 %v2333, %v2301
          %v2366 = vadd.f32 %v2334, %v2302
          %v2367 = vadd.f32 %v2335, %v2303
          %v2368 = vadd.f32 %v2336, %v2304
          %v2369 = vadd.f32 %v2337, %v2305
          %v2370 = vadd.f32 %v2338, %v2306
          %v2371 = vadd.f32 %v2339, %v2307
          %v2372 = vadd.f32 %v2340, %v2308
          %v2373 = vadd.f32 %v2341, %v2309
          %2374 = vst [vmem:[%s399] sm:$0xff] %v2342
          %2375 = vst [vmem:[%s399 + $0x8] sm:$0xff] %v2343
          %2376 = vst [vmem:[%s399 + $0x10] sm:$0xff] %v2344
          %2377 = vst [vmem:[%s399 + $0x18] sm:$0xff] %v2345
          %2378 = vst [vmem:[%s399 + $0x20] sm:$0xff] %v2346
          %2379 = vst [vmem:[%s399 + $0x28] sm:$0xff] %v2347
          %2380 = vst [vmem:[%s399 + $0x30] sm:$0xff] %v2348
          %2381 = vst [vmem:[%s399 + $0x38] sm:$0xff] %v2349
          %2382 = vst [vmem:[%s399 + $0x40] sm:$0xff] %v2350
          %2383 = vst [vmem:[%s399 + $0x48] sm:$0xff] %v2351
          %2384 = vst [vmem:[%s399 + $0x50] sm:$0xff] %v2352
          %2385 = vst [vmem:[%s399 + $0x58] sm:$0xff] %v2353
          %2386 = vst [vmem:[%s399 + $0x60] sm:$0xff] %v2354
          %2387 = vst [vmem:[%s399 + $0x68] sm:$0xff] %v2355
          %2388 = vst [vmem:[%s399 + $0x70] sm:$0xff] %v2356
          %2389 = vst [vmem:[%s399 + $0x78] sm:$0xff] %v2357
          %2390 = vst [vmem:[%s399 + $0x80] sm:$0xff] %v2358
          %2391 = vst [vmem:[%s399 + $0x88] sm:$0xff] %v2359
          %2392 = vst [vmem:[%s399 + $0x90] sm:$0xff] %v2360
          %2393 = vst [vmem:[%s399 + $0x98] sm:$0xff] %v2361
          %2394 = vst [vmem:[%s399 + $0xa0] sm:$0xff] %v2362
          %2395 = vst [vmem:[%s399 + $0xa8] sm:$0xff] %v2363
          %2396 = vst [vmem:[%s399 + $0xb0] sm:$0xff] %v2364
          %2397 = vst [vmem:[%s399 + $0xb8] sm:$0xff] %v2365
          %2398 = vst [vmem:[%s399 + $0xc0] sm:$0xff] %v2366
          %2399 = vst [vmem:[%s399 + $0xc8] sm:$0xff] %v2367
          %2400 = vst [vmem:[%s399 + $0xd0] sm:$0xff] %v2368
          %2401 = vst [vmem:[%s399 + $0xd8] sm:$0xff] %v2369
          %2402 = vst [vmem:[%s399 + $0xe0] sm:$0xff] %v2370
          %2403 = vst [vmem:[%s399 + $0xe8] sm:$0xff] %v2371
          %2404 = vst [vmem:[%s399 + $0xf0] sm:$0xff] %v2372
          %2405 = vst [vmem:[%s399 + $0xf8] sm:$0xff] %v2373
        $region68: #{tpu_custom_call.1} parent=47 // pred_fallthru
          _
        %s2406 = sand.u32 %s214, 1
        %s2407 = scalar_lea.sflag [#allocation6], %s2406
        %s2408 = sand.u32 %s214, 1
        %s2409 = smul.addr %s2408, 256
        %s2410 = scalar_lea.vmem [#allocation10], %s2409
        // Predicated region
        $region69: #{tpu_custom_call.1} parent=47 // pred_check
          %p2411 = pneg %p224
        $region70: #{tpu_custom_call.1} parent=47 // pred_check_branch
          %2413 = sbr.rel (%p2411) target = $region72
        $region71: #{tpu_custom_call.1} parent=47 // pred_region
          %s2414 = smul.u32 32, %s31
          %s2416 = ssub.s32 4096, 4096
          %2417 = vsyncadd %s2407, %s2416
          %s2418 = smul.addr %s2414, 128
          %s2419 = scalar_lea.hbm %s7, %s2418
          %s2420 = sshll.u32 %s2410, 4
          %s2421 = int_to_ptr.vmem [resolvable:$true] %s2420
          %2426 = dma.vmem_to_hbm [thread:$0]  %s2421, 4096, %s2419, %s2407, 128, 128, 8
        $region72: #{tpu_custom_call.1} parent=47 // pred_fallthru
          _
      $region48: #{tpu_custom_call.1} parent=5 // pred_fallthru
        _
      %p2427 = scmp.le.s32.totalorder 2, %s22
      // Predicated region
      $region73: #{tpu_custom_call.1} parent=5 // pred_check
        %p2428 = pneg %p2427
      $region74: #{tpu_custom_call.1} parent=5 // pred_check_branch
        %2430 = sbr.rel (%p2428) target = $region76
      $region75: #{tpu_custom_call.1} parent=5 // pred_region
        %s2431 = ssub.s32 %s22, 2
        // Predicated region
        $region77: #{tpu_custom_call.1} parent=75 // pred_check
          %p2432 = pneg %p230
        $region78: #{tpu_custom_call.1} parent=75 // pred_check_branch
          %2434 = sbr.rel (%p2432) target = $region80
        $region79: #{tpu_custom_call.1} parent=75 // pred_region
          %s2435 = sand.u32 %s215, 1
          %s2436 = scalar_lea.sflag [#allocation6], %s2435
          %s2437 = sand.u32 %s215, 1
          %s2438 = smul.addr %s2437, 256
          %s2439 = scalar_lea.vmem [#allocation10], %s2438
          %2440 = dma.done %s2436, 4096
        $region80: #{tpu_custom_call.1} parent=75 // pred_fallthru
          _
      $region76: #{tpu_custom_call.1} parent=5 // pred_fallthru
        _
    $region6: #{tpu_custom_call.1} parent=1 // loop_footer
      %s26 = sadd.s32 1, %s22
    $region7: #{tpu_custom_call.1} parent=1 // loop_footer_branch
      %21 = sbr.rel target = $region3
    $region8: #{tpu_custom_call.1} parent=1 // loop_exit
      _
    %2441 = vsyncpa [#allocation5], 1
    %s2442 = scalar_lea.sflag [#allocation5], 1
    %2443 = vsyncpa %s2442, 1
    %2444 = vsyncpa [#allocation8], 1
    %s2445 = scalar_lea.sflag [#allocation8], 1
    %2446 = vsyncpa %s2445, 1
    %2447 = vsyncpa [#allocation6], 1
    %s2448 = scalar_lea.sflag [#allocation6], 1
    %2449 = vsyncpa %s2448, 1

</llo_original>
